<compile_context>
chip_gen: v7x
topology: tpu7x:2x2x1
jax: 0.10.0
libtpu: 0.0.40
codegen_flags: <defaults>
</compile_context>

<pallas_src>
import functools

import jax
import jax.numpy as jnp
from jax.experimental import pallas as pl
from jax.experimental.pallas import tpu as pltpu


# ----------------------------------------------------------------------------
# Fused kernel: all LSTM layers + relu + FC head in one pallas_call.
# Gate order (after init-time permutation): [i, f, o | g].
# ----------------------------------------------------------------------------
def _fused_lstm_fc_kernel(x_ref, h0_ref, c0_ref, fcw_ref, fcb_ref, *rest,
                          num_layers, seq_len, batch_blk, hidden):
    """rest = [wih_0, whh_0, b_0, ..., wih_{L-1}, whh_{L-1}, b_{L-1},
               out_ref, gx_sc, (hseq_sc if num_layers > 1)]"""
    T, Bb, H = seq_len, batch_blk, hidden
    layer_refs = rest[:3 * num_layers]
    out_ref = rest[3 * num_layers]
    scratch = rest[3 * num_layers + 1:]
    gx_sc = scratch[0]                                   # (T, Bb, 4H) f32
    hseq_sc = scratch[1] if num_layers > 1 else None     # (T, Bb, H) bf16

    h_last = None
    for l in range(num_layers):
        wih_ref = layer_refs[3 * l + 0]   # (d_in, 4H)  bf16
        whh_ref = layer_refs[3 * l + 1]   # (H,    4H)  bf16
        b_ref = layer_refs[3 * l + 2]     # (1,    4H)  f32 (fused b_ih + b_hh)

        if l == 0:
            xin = x_ref[...].reshape(T * Bb, x_ref.shape[-1])    # bf16, (T*Bb, D_in)
        else:
            xin = hseq_sc[...].reshape(T * Bb, H)                # bf16, (T*Bb, H)

        # Hoisted input projection: one MXU-filling matmul for all T timesteps.
        gx = jnp.dot(xin, wih_ref[...],
                     preferred_element_type=jnp.float32) + b_ref[...]   # (T*Bb, 4H) f32
        # Park it in VMEM scratch so the unrolled loop doesn't hold it in vregs.
        gx_sc[...] = gx.reshape(T, Bb, 4 * H)

        whh_bf = whh_ref[...]                            # bf16, resident across the loop
        h = h0_ref[l]                                    # (Bb, H) f32
        c = c0_ref[l]                                    # (Bb, H) f32
        write_seq = (l + 1 < num_layers)                 # last layer's sequence unused

        # Statically unrolled recurrence (T small & static); only the small
        # recurrent dot + grouped elementwise gate math remain serial per step.
        for t in range(T):
            gates = gx_sc[t] + jnp.dot(h.astype(jnp.bfloat16), whh_bf,
                                       preferred_element_type=jnp.float32)  # (Bb, 4H) f32
            sig = jax.nn.sigmoid(gates[:, 0:3 * H])      # one EUP launch: [i | f | o]
            g_g = jnp.tanh(gates[:, 3 * H:4 * H])
            i_g = sig[:, 0:H]
            f_g = sig[:, H:2 * H]
            o_g = sig[:, 2 * H:3 * H]
            c = f_g * c + i_g * g_g
            h = o_g * jnp.tanh(c)
            if write_seq:
                hseq_sc[t] = h.astype(jnp.bfloat16)      # full-sublane bf16 store
        h_last = h

    # Classifier head fused in: relu(hn[-1]) @ W_fc^T + b_fc
    h_relu = jnp.maximum(h_last, 0.0)
    out_ref[...] = (jnp.dot(h_relu.astype(jnp.bfloat16), fcw_ref[...],
                            preferred_element_type=jnp.float32)
                    + fcb_ref[...]).astype(out_ref.dtype)


# ----------------------------------------------------------------------------
# Full forward pass (layout plumbing in plain JAX; all math in the one kernel)
# ----------------------------------------------------------------------------
def lstm_classifier_forward(x, params, h0, c0, *, batch_block=8):
    """x: (B, 1, D_in, T) exactly like the PyTorch module input."""
    B, _, D_in, T = x.shape
    L, _, H = h0.shape
    C = params["fc_w_t"].shape[1]

    # (B, 1, D_in, T) -> (B, D_in, T) -> time-major (T, B, D_in)
    xt = jnp.transpose(jnp.squeeze(x, axis=1), (2, 0, 1))

    # Pad batch to a multiple of the (sublane-aligned) batch block.
    Bb = max(8, batch_block)
    B_pad = ((B + Bb - 1) // Bb) * Bb
    pad = B_pad - B
    if pad:
        xt = jnp.pad(xt, ((0, 0), (0, pad), (0, 0)))
        h0 = jnp.pad(h0, ((0, 0), (0, pad), (0, 0)))
        c0 = jnp.pad(c0, ((0, 0), (0, pad), (0, 0)))
    xt = xt.astype(jnp.bfloat16)   # halve x DMA bytes; cast once in the wrapper

    layer_args = []
    in_specs = [
        pl.BlockSpec((T, Bb, D_in), lambda b: (0, b, 0)),   # x (batch-blocked)
        pl.BlockSpec((L, Bb, H), lambda b: (0, b, 0)),      # h0
        pl.BlockSpec((L, Bb, H), lambda b: (0, b, 0)),      # c0
        pl.BlockSpec((H, C), lambda b: (0, 0)),             # fc weight (resident)
        pl.BlockSpec((1, C), lambda b: (0, 0)),             # fc bias
    ]
    for p in params["layers"]:
        layer_args += [p["wih_t"], p["whh_t"], p["bias"]]
        d_in_l = p["wih_t"].shape[0]
        in_specs += [
            pl.BlockSpec((d_in_l, 4 * H), lambda b: (0, 0)),
            pl.BlockSpec((H, 4 * H), lambda b: (0, 0)),
            pl.BlockSpec((1, 4 * H), lambda b: (0, 0)),
        ]

    scratch_shapes = [pltpu.VMEM((T, Bb, 4 * H), jnp.float32)]   # hoisted gates
    if L > 1:
        scratch_shapes.append(pltpu.VMEM((T, Bb, H), jnp.bfloat16))  # inter-layer seq

    # Explicit VMEM budget: weights + x + states + gx + hseq, with headroom
    # (capped at 64 MiB so it stays within v7x physical VMEM).
    def _nbytes(a):
        return int(a.size) * a.dtype.itemsize
    needed = (sum(_nbytes(w) for w in layer_args)
              + _nbytes(params["fc_w_t"]) + _nbytes(params["fc_b"])
              + T * Bb * D_in * 2 + 2 * L * Bb * H * 4 + Bb * C * 4
              + T * Bb * 4 * H * 4 + (T * Bb * H * 2 if L > 1 else 0))
    vmem_limit = int(min(max(32 * 1024 * 1024, 3 * needed), 64 * 1024 * 1024))

    kernel = functools.partial(_fused_lstm_fc_kernel,
                               num_layers=L, seq_len=T, batch_blk=Bb, hidden=H)
    out = pl.pallas_call(
        kernel,
        out_shape=jax.ShapeDtypeStruct((B_pad, C), jnp.float32),
        grid_spec=pltpu.PrefetchScalarGridSpec(
            num_scalar_prefetch=0,
            grid=(B_pad // Bb,),
            in_specs=in_specs,
            out_specs=pl.BlockSpec((Bb, C), lambda b: (b, 0)),
            scratch_shapes=scratch_shapes),
        compiler_params=pltpu.CompilerParams(
            dimension_semantics=("parallel",),      # batch blocks shard across TCs (v7x)
            vmem_limit_bytes=vmem_limit),
    )(xt, h0, c0, params["fc_w_t"], params["fc_b"], *layer_args)
    # TODO(synk): PyTorch applies inter-layer dropout only in training mode;
    # inference semantics (no dropout) are implemented here.
    return out[:B]


# ----------------------------------------------------------------------------
# Deterministic parameter construction (matches PyTorch LSTM/Linear shapes).
# Gate rows are permuted from PyTorch [i,f,g,o] to [i,f,o,g] (weights AND the
# fused bias identically) so the kernel can do one grouped sigmoid.  Matmul
# weights are stored pre-transposed in bf16; biases stay f32.
# ----------------------------------------------------------------------------
def _permute_gates_rows(w, H):
    # rows [i | f | g | o] -> [i | f | o | g]
    return jnp.concatenate([w[0:2 * H], w[3 * H:4 * H], w[2 * H:3 * H]], axis=0)


def init_params(key, input_size, hidden_size, num_layers, n_classes):
    n_out = n_classes if n_classes > 2 else 1
    H = hidden_size
    k_lstm = 1.0 / jnp.sqrt(H)
    layers = []
    for l in range(num_layers):
        d_in = input_size if l == 0 else H
        key, k1, k2, k3, k4 = jax.random.split(key, 5)
        w_ih = jax.random.uniform(k1, (4 * H, d_in), minval=-k_lstm, maxval=k_lstm,
                                  dtype=jnp.float32)
        w_hh = jax.random.uniform(k2, (4 * H, H), minval=-k_lstm, maxval=k_lstm,
                                  dtype=jnp.float32)
        b_ih = jax.random.uniform(k3, (4 * H,), minval=-k_lstm, maxval=k_lstm,
                                  dtype=jnp.float32)
        b_hh = jax.random.uniform(k4, (4 * H,), minval=-k_lstm, maxval=k_lstm,
                                  dtype=jnp.float32)
        w_ih = _permute_gates_rows(w_ih, H)
        w_hh = _permute_gates_rows(w_hh, H)
        bias = _permute_gates_rows((b_ih + b_hh)[:, None], H)[:, 0]
        layers.append({
            "wih_t": jnp.transpose(w_ih).astype(jnp.bfloat16),     # (d_in, 4H)
            "whh_t": jnp.transpose(w_hh).astype(jnp.bfloat16),     # (H, 4H)
            "bias": bias.reshape(1, 4 * H),                        # (1, 4H) f32
        })
    k_fc = 1.0 / jnp.sqrt(H)
    key, k5, k6 = jax.random.split(key, 3)
    w_fc = jax.random.uniform(k5, (n_out, H), minval=-k_fc, maxval=k_fc,
                              dtype=jnp.float32)
    b_fc = jax.random.uniform(k6, (n_out,), minval=-k_fc, maxval=k_fc,
                              dtype=jnp.float32)
    return {
        "layers": layers,
        "fc_w_t": jnp.transpose(w_fc).astype(jnp.bfloat16),        # (H, n_out)
        "fc_b": b_fc.reshape(1, n_out),                            # (1, n_out) f32
    }, key


if __name__ == "__main__":
    # Small shapes consistent with the module's forward.
    B, D_in, T = 2, 16, 8
    hidden_size, num_layers, n_classes = 32, 2, 3

    key = jax.random.PRNGKey(0)
    params, key = init_params(key, D_in, hidden_size, num_layers, n_classes)

    key, kx, kh, kc = jax.random.split(key, 4)
    x = jax.random.normal(kx, (B, 1, D_in, T), dtype=jnp.float32)
    # h_0 / c_0 are torch.randn in the reference forward; generated deterministically here.
    h0 = jax.random.normal(kh, (num_layers, B, hidden_size), dtype=jnp.float32)
    c0 = jax.random.normal(kc, (num_layers, B, hidden_size), dtype=jnp.float32)

    out = lstm_classifier_forward(x, params, h0, c0)
    out = jax.block_until_ready(out)
    assert out.shape == (B, n_classes)
    print("KERNEL_OK")
</pallas_src>

<mosaic_0001>
module attributes {stable_mosaic.version = 11 : i64} {
  func.func @_fused_lstm_fc_kernel(%arg0: i32, %arg1: memref<8x8x16xbf16, #tpu.memory_space<vmem>>, %arg2: memref<2x8x32xf32, #tpu.memory_space<vmem>>, %arg3: memref<2x8x32xf32, #tpu.memory_space<vmem>>, %arg4: memref<32x3xbf16, #tpu.memory_space<vmem>>, %arg5: memref<1x3xf32, #tpu.memory_space<vmem>>, %arg6: memref<16x128xbf16, #tpu.memory_space<vmem>>, %arg7: memref<32x128xbf16, #tpu.memory_space<vmem>>, %arg8: memref<1x128xf32, #tpu.memory_space<vmem>>, %arg9: memref<32x128xbf16, #tpu.memory_space<vmem>>, %arg10: memref<32x128xbf16, #tpu.memory_space<vmem>>, %arg11: memref<1x128xf32, #tpu.memory_space<vmem>>, %arg12: memref<8x3xf32, #tpu.memory_space<vmem>>, %arg13: memref<8x8x128xf32, #tpu.memory_space<vmem>>, %arg14: memref<8x8x32xbf16, #tpu.memory_space<vmem>>) attributes {dimension_semantics = [#tpu.dimension_semantics<parallel>], iteration_bounds = array<i64: 1>, scalar_prefetch = 0 : i64, scratch_operands = 2 : i64, tpu.core_type = #tpu.core_type<tc>, window_params = [{transform_indices = @transform_0, window_bounds = array<i64: 8, 8, 16>}, {transform_indices = @transform_1, window_bounds = array<i64: 2, 8, 32>}, {transform_indices = @transform_2, window_bounds = array<i64: 2, 8, 32>}, {pipeline_mode = #tpu.pipeline_mode<synchronous>, transform_indices = @transform_3, window_bounds = array<i64: 32, 3>}, {pipeline_mode = #tpu.pipeline_mode<synchronous>, transform_indices = @transform_4, window_bounds = array<i64: 1, 3>}, {pipeline_mode = #tpu.pipeline_mode<synchronous>, transform_indices = @transform_5, window_bounds = array<i64: 16, 128>}, {pipeline_mode = #tpu.pipeline_mode<synchronous>, transform_indices = @transform_6, window_bounds = array<i64: 32, 128>}, {pipeline_mode = #tpu.pipeline_mode<synchronous>, transform_indices = @transform_7, window_bounds = array<i64: 1, 128>}, {pipeline_mode = #tpu.pipeline_mode<synchronous>, transform_indices = @transform_8, window_bounds = array<i64: 32, 128>}, {pipeline_mode = #tpu.pipeline_mode<synchronous>, transform_indices = @transform_9, window_bounds = array<i64: 32, 128>}, {pipeline_mode = #tpu.pipeline_mode<synchronous>, transform_indices = @transform_10, window_bounds = array<i64: 1, 128>}, {transform_indices = @transform_11, window_bounds = array<i64: 8, 3>}]} {
    %c0 = arith.constant 0 : index
    %c0_0 = arith.constant 0 : index
    %c0_1 = arith.constant 0 : index
    %0 = vector.load %arg1[%c0, %c0_0, %c0_1] : memref<8x8x16xbf16, #tpu.memory_space<vmem>>, vector<8x8x16xbf16>
    %1 = vector.shape_cast %0 : vector<8x8x16xbf16> to vector<64x16xbf16>
    %c0_2 = arith.constant 0 : index
    %c0_3 = arith.constant 0 : index
    %2 = vector.load %arg6[%c0_2, %c0_3] : memref<16x128xbf16, #tpu.memory_space<vmem>>, vector<16x128xbf16>
    %cst = arith.constant dense<0.000000e+00> : vector<64x128xf32>
    %3 = tpu.matmul %1, %2, %cst {dimension_numbers = #tpu.dot_dimension_numbers<[1], [0], [0], [1], [0, 0, 1, 1], [], []>} : vector<64x16xbf16>, vector<16x128xbf16>, vector<64x128xf32> -> vector<64x128xf32>
    %c0_4 = arith.constant 0 : index
    %c0_5 = arith.constant 0 : index
    %4 = vector.load %arg8[%c0_4, %c0_5] : memref<1x128xf32, #tpu.memory_space<vmem>>, vector<1x128xf32>
    %5 = vector.broadcast %4 : vector<1x128xf32> to vector<64x128xf32>
    %6 = arith.addf %3, %5 : vector<64x128xf32>
    %7 = vector.shape_cast %6 : vector<64x128xf32> to vector<8x8x128xf32>
    %c0_6 = arith.constant 0 : index
    %c0_7 = arith.constant 0 : index
    %c0_8 = arith.constant 0 : index
    %8 = vector.load %arg13[%c0_6, %c0_7, %c0_8] : memref<8x8x128xf32, #tpu.memory_space<vmem>>, vector<8x8x128xf32>
    tpu.vector_store %arg13[%c0_6, %c0_7, %c0_8], %7 {strides = array<i32>} : memref<8x8x128xf32, #tpu.memory_space<vmem>>, vector<8x8x128xf32>,
    %c0_9 = arith.constant 0 : index
    %c0_10 = arith.constant 0 : index
    %9 = vector.load %arg7[%c0_9, %c0_10] : memref<32x128xbf16, #tpu.memory_space<vmem>>, vector<32x128xbf16>
    %c0_11 = arith.constant 0 : index
    %c0_12 = arith.constant 0 : index
    %c0_13 = arith.constant 0 : index
    %10 = vector.load %arg2[%c0_11, %c0_12, %c0_13] : memref<2x8x32xf32, #tpu.memory_space<vmem>>, vector<1x8x32xf32>
    %11 = vector.shape_cast %10 : vector<1x8x32xf32> to vector<8x32xf32>
    %c0_14 = arith.constant 0 : index
    %c0_15 = arith.constant 0 : index
    %c0_16 = arith.constant 0 : index
    %12 = vector.load %arg3[%c0_14, %c0_15, %c0_16] : memref<2x8x32xf32, #tpu.memory_space<vmem>>, vector<1x8x32xf32>
    %13 = vector.shape_cast %12 : vector<1x8x32xf32> to vector<8x32xf32>
    %c0_17 = arith.constant 0 : index
    %c0_18 = arith.constant 0 : index
    %c0_19 = arith.constant 0 : index
    %14 = vector.load %arg13[%c0_17, %c0_18, %c0_19] : memref<8x8x128xf32, #tpu.memory_space<vmem>>, vector<1x8x128xf32>
    %15 = vector.shape_cast %14 : vector<1x8x128xf32> to vector<8x128xf32>
    %16 = arith.truncf %11 : vector<8x32xf32> to vector<8x32xbf16>
    %cst_20 = arith.constant dense<0.000000e+00> : vector<8x128xf32>
    %17 = tpu.matmul %16, %9, %cst_20 {dimension_numbers = #tpu.dot_dimension_numbers<[1], [0], [0], [1], [0, 0, 1, 1], [], []>} : vector<8x32xbf16>, vector<32x128xbf16>, vector<8x128xf32> -> vector<8x128xf32>
    %18 = arith.addf %15, %17 : vector<8x128xf32>
    %19 = vector.extract_strided_slice %18 {offsets = [0, 0], sizes = [8, 96], strides = [1, 1]} : vector<8x128xf32> to vector<8x96xf32>
    %20 = arith.negf %19 : vector<8x96xf32>
    %21 = math.exp %20 : vector<8x96xf32>
    %cst_21 = arith.constant 1.000000e+00 : f32
    %22 = vector.broadcast %cst_21 : f32 to vector<8x96xf32>
    %23 = arith.addf %22, %21 : vector<8x96xf32>
    %24 = arith.divf %22, %23 : vector<8x96xf32>
    %25 = vector.extract_strided_slice %18 {offsets = [0, 96], sizes = [8, 32], strides = [1, 1]} : vector<8x128xf32> to vector<8x32xf32>
    %26 = math.tanh %25 : vector<8x32xf32>
    %27 = vector.extract_strided_slice %24 {offsets = [0, 0], sizes = [8, 32], strides = [1, 1]} : vector<8x96xf32> to vector<8x32xf32>
    %28 = vector.extract_strided_slice %24 {offsets = [0, 32], sizes = [8, 32], strides = [1, 1]} : vector<8x96xf32> to vector<8x32xf32>
    %29 = vector.extract_strided_slice %24 {offsets = [0, 64], sizes = [8, 32], strides = [1, 1]} : vector<8x96xf32> to vector<8x32xf32>
    %30 = arith.mulf %28, %13 : vector<8x32xf32>
    %31 = arith.mulf %27, %26 : vector<8x32xf32>
    %32 = arith.addf %30, %31 : vector<8x32xf32>
    %33 = math.tanh %32 : vector<8x32xf32>
    %34 = arith.mulf %29, %33 : vector<8x32xf32>
    %35 = arith.truncf %34 : vector<8x32xf32> to vector<8x32xbf16>
    %c0_22 = arith.constant 0 : index
    %c0_23 = arith.constant 0 : index
    %c0_24 = arith.constant 0 : index
    %36 = vector.load %arg14[%c0_22, %c0_23, %c0_24] : memref<8x8x32xbf16, #tpu.memory_space<vmem>>, vector<1x8x32xbf16>
    %37 = vector.shape_cast %36 : vector<1x8x32xbf16> to vector<8x32xbf16>
    %38 = vector.shape_cast %35 : vector<8x32xbf16> to vector<1x8x32xbf16>
    tpu.vector_store %arg14[%c0_22, %c0_23, %c0_24], %38 {strides = array<i32>} : memref<8x8x32xbf16, #tpu.memory_space<vmem>>, vector<1x8x32xbf16>,
    %c1 = arith.constant 1 : index
    %c0_25 = arith.constant 0 : index
    %c0_26 = arith.constant 0 : index
    %39 = vector.load %arg13[%c1, %c0_25, %c0_26] : memref<8x8x128xf32, #tpu.memory_space<vmem>>, vector<1x8x128xf32>
    %40 = vector.shape_cast %39 : vector<1x8x128xf32> to vector<8x128xf32>
    %41 = arith.truncf %34 : vector<8x32xf32> to vector<8x32xbf16>
    %cst_27 = arith.constant dense<0.000000e+00> : vector<8x128xf32>
    %42 = tpu.matmul %41, %9, %cst_27 {dimension_numbers = #tpu.dot_dimension_numbers<[1], [0], [0], [1], [0, 0, 1, 1], [], []>} : vector<8x32xbf16>, vector<32x128xbf16>, vector<8x128xf32> -> vector<8x128xf32>
    %43 = arith.addf %40, %42 : vector<8x128xf32>
    %44 = vector.extract_strided_slice %43 {offsets = [0, 0], sizes = [8, 96], strides = [1, 1]} : vector<8x128xf32> to vector<8x96xf32>
    %45 = arith.negf %44 : vector<8x96xf32>
    %46 = math.exp %45 : vector<8x96xf32>
    %cst_28 = arith.constant 1.000000e+00 : f32
    %47 = vector.broadcast %cst_28 : f32 to vector<8x96xf32>
    %48 = arith.addf %47, %46 : vector<8x96xf32>
    %49 = arith.divf %47, %48 : vector<8x96xf32>
    %50 = vector.extract_strided_slice %43 {offsets = [0, 96], sizes = [8, 32], strides = [1, 1]} : vector<8x128xf32> to vector<8x32xf32>
    %51 = math.tanh %50 : vector<8x32xf32>
    %52 = vector.extract_strided_slice %49 {offsets = [0, 0], sizes = [8, 32], strides = [1, 1]} : vector<8x96xf32> to vector<8x32xf32>
    %53 = vector.extract_strided_slice %49 {offsets = [0, 32], sizes = [8, 32], strides = [1, 1]} : vector<8x96xf32> to vector<8x32xf32>
    %54 = vector.extract_strided_slice %49 {offsets = [0, 64], sizes = [8, 32], strides = [1, 1]} : vector<8x96xf32> to vector<8x32xf32>
    %55 = arith.mulf %53, %32 : vector<8x32xf32>
    %56 = arith.mulf %52, %51 : vector<8x32xf32>
    %57 = arith.addf %55, %56 : vector<8x32xf32>
    %58 = math.tanh %57 : vector<8x32xf32>
    %59 = arith.mulf %54, %58 : vector<8x32xf32>
    %60 = arith.truncf %59 : vector<8x32xf32> to vector<8x32xbf16>
    %c1_29 = arith.constant 1 : index
    %c0_30 = arith.constant 0 : index
    %c0_31 = arith.constant 0 : index
    %61 = vector.load %arg14[%c1_29, %c0_30, %c0_31] : memref<8x8x32xbf16, #tpu.memory_space<vmem>>, vector<1x8x32xbf16>
    %62 = vector.shape_cast %61 : vector<1x8x32xbf16> to vector<8x32xbf16>
    %63 = vector.shape_cast %60 : vector<8x32xbf16> to vector<1x8x32xbf16>
    tpu.vector_store %arg14[%c1_29, %c0_30, %c0_31], %63 {strides = array<i32>} : memref<8x8x32xbf16, #tpu.memory_space<vmem>>, vector<1x8x32xbf16>,
    %c2 = arith.constant 2 : index
    %c0_32 = arith.constant 0 : index
    %c0_33 = arith.constant 0 : index
    %64 = vector.load %arg13[%c2, %c0_32, %c0_33] : memref<8x8x128xf32, #tpu.memory_space<vmem>>, vector<1x8x128xf32>
    %65 = vector.shape_cast %64 : vector<1x8x128xf32> to vector<8x128xf32>
    %66 = arith.truncf %59 : vector<8x32xf32> to vector<8x32xbf16>
    %cst_34 = arith.constant dense<0.000000e+00> : vector<8x128xf32>
    %67 = tpu.matmul %66, %9, %cst_34 {dimension_numbers = #tpu.dot_dimension_numbers<[1], [0], [0], [1], [0, 0, 1, 1], [], []>} : vector<8x32xbf16>, vector<32x128xbf16>, vector<8x128xf32> -> vector<8x128xf32>
    %68 = arith.addf %65, %67 : vector<8x128xf32>
    %69 = vector.extract_strided_slice %68 {offsets = [0, 0], sizes = [8, 96], strides = [1, 1]} : vector<8x128xf32> to vector<8x96xf32>
    %70 = arith.negf %69 : vector<8x96xf32>
    %71 = math.exp %70 : vector<8x96xf32>
    %cst_35 = arith.constant 1.000000e+00 : f32
    %72 = vector.broadcast %cst_35 : f32 to vector<8x96xf32>
    %73 = arith.addf %72, %71 : vector<8x96xf32>
    %74 = arith.divf %72, %73 : vector<8x96xf32>
    %75 = vector.extract_strided_slice %68 {offsets = [0, 96], sizes = [8, 32], strides = [1, 1]} : vector<8x128xf32> to vector<8x32xf32>
    %76 = math.tanh %75 : vector<8x32xf32>
    %77 = vector.extract_strided_slice %74 {offsets = [0, 0], sizes = [8, 32], strides = [1, 1]} : vector<8x96xf32> to vector<8x32xf32>
    %78 = vector.extract_strided_slice %74 {offsets = [0, 32], sizes = [8, 32], strides = [1, 1]} : vector<8x96xf32> to vector<8x32xf32>
    %79 = vector.extract_strided_slice %74 {offsets = [0, 64], sizes = [8, 32], strides = [1, 1]} : vector<8x96xf32> to vector<8x32xf32>
    %80 = arith.mulf %78, %57 : vector<8x32xf32>
    %81 = arith.mulf %77, %76 : vector<8x32xf32>
    %82 = arith.addf %80, %81 : vector<8x32xf32>
    %83 = math.tanh %82 : vector<8x32xf32>
    %84 = arith.mulf %79, %83 : vector<8x32xf32>
    %85 = arith.truncf %84 : vector<8x32xf32> to vector<8x32xbf16>
    %c2_36 = arith.constant 2 : index
    %c0_37 = arith.constant 0 : index
    %c0_38 = arith.constant 0 : index
    %86 = vector.load %arg14[%c2_36, %c0_37, %c0_38] : memref<8x8x32xbf16, #tpu.memory_space<vmem>>, vector<1x8x32xbf16>
    %87 = vector.shape_cast %86 : vector<1x8x32xbf16> to vector<8x32xbf16>
    %88 = vector.shape_cast %85 : vector<8x32xbf16> to vector<1x8x32xbf16>
    tpu.vector_store %arg14[%c2_36, %c0_37, %c0_38], %88 {strides = array<i32>} : memref<8x8x32xbf16, #tpu.memory_space<vmem>>, vector<1x8x32xbf16>,
    %c3 = arith.constant 3 : index
    %c0_39 = arith.constant 0 : index
    %c0_40 = arith.constant 0 : index
    %89 = vector.load %arg13[%c3, %c0_39, %c0_40] : memref<8x8x128xf32, #tpu.memory_space<vmem>>, vector<1x8x128xf32>
    %90 = vector.shape_cast %89 : vector<1x8x128xf32> to vector<8x128xf32>
    %91 = arith.truncf %84 : vector<8x32xf32> to vector<8x32xbf16>
    %cst_41 = arith.constant dense<0.000000e+00> : vector<8x128xf32>
    %92 = tpu.matmul %91, %9, %cst_41 {dimension_numbers = #tpu.dot_dimension_numbers<[1], [0], [0], [1], [0, 0, 1, 1], [], []>} : vector<8x32xbf16>, vector<32x128xbf16>, vector<8x128xf32> -> vector<8x128xf32>
    %93 = arith.addf %90, %92 : vector<8x128xf32>
    %94 = vector.extract_strided_slice %93 {offsets = [0, 0], sizes = [8, 96], strides = [1, 1]} : vector<8x128xf32> to vector<8x96xf32>
    %95 = arith.negf %94 : vector<8x96xf32>
    %96 = math.exp %95 : vector<8x96xf32>
    %cst_42 = arith.constant 1.000000e+00 : f32
    %97 = vector.broadcast %cst_42 : f32 to vector<8x96xf32>
    %98 = arith.addf %97, %96 : vector<8x96xf32>
    %99 = arith.divf %97, %98 : vector<8x96xf32>
    %100 = vector.extract_strided_slice %93 {offsets = [0, 96], sizes = [8, 32], strides = [1, 1]} : vector<8x128xf32> to vector<8x32xf32>
    %101 = math.tanh %100 : vector<8x32xf32>
    %102 = vector.extract_strided_slice %99 {offsets = [0, 0], sizes = [8, 32], strides = [1, 1]} : vector<8x96xf32> to vector<8x32xf32>
    %103 = vector.extract_strided_slice %99 {offsets = [0, 32], sizes = [8, 32], strides = [1, 1]} : vector<8x96xf32> to vector<8x32xf32>
    %104 = vector.extract_strided_slice %99 {offsets = [0, 64], sizes = [8, 32], strides = [1, 1]} : vector<8x96xf32> to vector<8x32xf32>
    %105 = arith.mulf %103, %82 : vector<8x32xf32>
    %106 = arith.mulf %102, %101 : vector<8x32xf32>
    %107 = arith.addf %105, %106 : vector<8x32xf32>
    %108 = math.tanh %107 : vector<8x32xf32>
    %109 = arith.mulf %104, %108 : vector<8x32xf32>
    %110 = arith.truncf %109 : vector<8x32xf32> to vector<8x32xbf16>
    %c3_43 = arith.constant 3 : index
    %c0_44 = arith.constant 0 : index
    %c0_45 = arith.constant 0 : index
    %111 = vector.load %arg14[%c3_43, %c0_44, %c0_45] : memref<8x8x32xbf16, #tpu.memory_space<vmem>>, vector<1x8x32xbf16>
    %112 = vector.shape_cast %111 : vector<1x8x32xbf16> to vector<8x32xbf16>
    %113 = vector.shape_cast %110 : vector<8x32xbf16> to vector<1x8x32xbf16>
    tpu.vector_store %arg14[%c3_43, %c0_44, %c0_45], %113 {strides = array<i32>} : memref<8x8x32xbf16, #tpu.memory_space<vmem>>, vector<1x8x32xbf16>,
    %c4 = arith.constant 4 : index
    %c0_46 = arith.constant 0 : index
    %c0_47 = arith.constant 0 : index
    %114 = vector.load %arg13[%c4, %c0_46, %c0_47] : memref<8x8x128xf32, #tpu.memory_space<vmem>>, vector<1x8x128xf32>
    %115 = vector.shape_cast %114 : vector<1x8x128xf32> to vector<8x128xf32>
    %116 = arith.truncf %109 : vector<8x32xf32> to vector<8x32xbf16>
    %cst_48 = arith.constant dense<0.000000e+00> : vector<8x128xf32>
    %117 = tpu.matmul %116, %9, %cst_48 {dimension_numbers = #tpu.dot_dimension_numbers<[1], [0], [0], [1], [0, 0, 1, 1], [], []>} : vector<8x32xbf16>, vector<32x128xbf16>, vector<8x128xf32> -> vector<8x128xf32>
    %118 = arith.addf %115, %117 : vector<8x128xf32>
    %119 = vector.extract_strided_slice %118 {offsets = [0, 0], sizes = [8, 96], strides = [1, 1]} : vector<8x128xf32> to vector<8x96xf32>
    %120 = arith.negf %119 : vector<8x96xf32>
    %121 = math.exp %120 : vector<8x96xf32>
    %cst_49 = arith.constant 1.000000e+00 : f32
    %122 = vector.broadcast %cst_49 : f32 to vector<8x96xf32>
    %123 = arith.addf %122, %121 : vector<8x96xf32>
    %124 = arith.divf %122, %123 : vector<8x96xf32>
    %125 = vector.extract_strided_slice %118 {offsets = [0, 96], sizes = [8, 32], strides = [1, 1]} : vector<8x128xf32> to vector<8x32xf32>
    %126 = math.tanh %125 : vector<8x32xf32>
    %127 = vector.extract_strided_slice %124 {offsets = [0, 0], sizes = [8, 32], strides = [1, 1]} : vector<8x96xf32> to vector<8x32xf32>
    %128 = vector.extract_strided_slice %124 {offsets = [0, 32], sizes = [8, 32], strides = [1, 1]} : vector<8x96xf32> to vector<8x32xf32>
    %129 = vector.extract_strided_slice %124 {offsets = [0, 64], sizes = [8, 32], strides = [1, 1]} : vector<8x96xf32> to vector<8x32xf32>
    %130 = arith.mulf %128, %107 : vector<8x32xf32>
    %131 = arith.mulf %127, %126 : vector<8x32xf32>
    %132 = arith.addf %130, %131 : vector<8x32xf32>
    %133 = math.tanh %132 : vector<8x32xf32>
    %134 = arith.mulf %129, %133 : vector<8x32xf32>
    %135 = arith.truncf %134 : vector<8x32xf32> to vector<8x32xbf16>
    %c4_50 = arith.constant 4 : index
    %c0_51 = arith.constant 0 : index
    %c0_52 = arith.constant 0 : index
    %136 = vector.load %arg14[%c4_50, %c0_51, %c0_52] : memref<8x8x32xbf16, #tpu.memory_space<vmem>>, vector<1x8x32xbf16>
    %137 = vector.shape_cast %136 : vector<1x8x32xbf16> to vector<8x32xbf16>
    %138 = vector.shape_cast %135 : vector<8x32xbf16> to vector<1x8x32xbf16>
    tpu.vector_store %arg14[%c4_50, %c0_51, %c0_52], %138 {strides = array<i32>} : memref<8x8x32xbf16, #tpu.memory_space<vmem>>, vector<1x8x32xbf16>,
    %c5 = arith.constant 5 : index
    %c0_53 = arith.constant 0 : index
    %c0_54 = arith.constant 0 : index
    %139 = vector.load %arg13[%c5, %c0_53, %c0_54] : memref<8x8x128xf32, #tpu.memory_space<vmem>>, vector<1x8x128xf32>
    %140 = vector.shape_cast %139 : vector<1x8x128xf32> to vector<8x128xf32>
    %141 = arith.truncf %134 : vector<8x32xf32> to vector<8x32xbf16>
    %cst_55 = arith.constant dense<0.000000e+00> : vector<8x128xf32>
    %142 = tpu.matmul %141, %9, %cst_55 {dimension_numbers = #tpu.dot_dimension_numbers<[1], [0], [0], [1], [0, 0, 1, 1], [], []>} : vector<8x32xbf16>, vector<32x128xbf16>, vector<8x128xf32> -> vector<8x128xf32>
    %143 = arith.addf %140, %142 : vector<8x128xf32>
    %144 = vector.extract_strided_slice %143 {offsets = [0, 0], sizes = [8, 96], strides = [1, 1]} : vector<8x128xf32> to vector<8x96xf32>
    %145 = arith.negf %144 : vector<8x96xf32>
    %146 = math.exp %145 : vector<8x96xf32>
    %cst_56 = arith.constant 1.000000e+00 : f32
    %147 = vector.broadcast %cst_56 : f32 to vector<8x96xf32>
    %148 = arith.addf %147, %146 : vector<8x96xf32>
    %149 = arith.divf %147, %148 : vector<8x96xf32>
    %150 = vector.extract_strided_slice %143 {offsets = [0, 96], sizes = [8, 32], strides = [1, 1]} : vector<8x128xf32> to vector<8x32xf32>
    %151 = math.tanh %150 : vector<8x32xf32>
    %152 = vector.extract_strided_slice %149 {offsets = [0, 0], sizes = [8, 32], strides = [1, 1]} : vector<8x96xf32> to vector<8x32xf32>
    %153 = vector.extract_strided_slice %149 {offsets = [0, 32], sizes = [8, 32], strides = [1, 1]} : vector<8x96xf32> to vector<8x32xf32>
    %154 = vector.extract_strided_slice %149 {offsets = [0, 64], sizes = [8, 32], strides = [1, 1]} : vector<8x96xf32> to vector<8x32xf32>
    %155 = arith.mulf %153, %132 : vector<8x32xf32>
    %156 = arith.mulf %152, %151 : vector<8x32xf32>
    %157 = arith.addf %155, %156 : vector<8x32xf32>
    %158 = math.tanh %157 : vector<8x32xf32>
    %159 = arith.mulf %154, %158 : vector<8x32xf32>
    %160 = arith.truncf %159 : vector<8x32xf32> to vector<8x32xbf16>
    %c5_57 = arith.constant 5 : index
    %c0_58 = arith.constant 0 : index
    %c0_59 = arith.constant 0 : index
    %161 = vector.load %arg14[%c5_57, %c0_58, %c0_59] : memref<8x8x32xbf16, #tpu.memory_space<vmem>>, vector<1x8x32xbf16>
    %162 = vector.shape_cast %161 : vector<1x8x32xbf16> to vector<8x32xbf16>
    %163 = vector.shape_cast %160 : vector<8x32xbf16> to vector<1x8x32xbf16>
    tpu.vector_store %arg14[%c5_57, %c0_58, %c0_59], %163 {strides = array<i32>} : memref<8x8x32xbf16, #tpu.memory_space<vmem>>, vector<1x8x32xbf16>,
    %c6 = arith.constant 6 : index
    %c0_60 = arith.constant 0 : index
    %c0_61 = arith.constant 0 : index
    %164 = vector.load %arg13[%c6, %c0_60, %c0_61] : memref<8x8x128xf32, #tpu.memory_space<vmem>>, vector<1x8x128xf32>
    %165 = vector.shape_cast %164 : vector<1x8x128xf32> to vector<8x128xf32>
    %166 = arith.truncf %159 : vector<8x32xf32> to vector<8x32xbf16>
    %cst_62 = arith.constant dense<0.000000e+00> : vector<8x128xf32>
    %167 = tpu.matmul %166, %9, %cst_62 {dimension_numbers = #tpu.dot_dimension_numbers<[1], [0], [0], [1], [0, 0, 1, 1], [], []>} : vector<8x32xbf16>, vector<32x128xbf16>, vector<8x128xf32> -> vector<8x128xf32>
    %168 = arith.addf %165, %167 : vector<8x128xf32>
    %169 = vector.extract_strided_slice %168 {offsets = [0, 0], sizes = [8, 96], strides = [1, 1]} : vector<8x128xf32> to vector<8x96xf32>
    %170 = arith.negf %169 : vector<8x96xf32>
    %171 = math.exp %170 : vector<8x96xf32>
    %cst_63 = arith.constant 1.000000e+00 : f32
    %172 = vector.broadcast %cst_63 : f32 to vector<8x96xf32>
    %173 = arith.addf %172, %171 : vector<8x96xf32>
    %174 = arith.divf %172, %173 : vector<8x96xf32>
    %175 = vector.extract_strided_slice %168 {offsets = [0, 96], sizes = [8, 32], strides = [1, 1]} : vector<8x128xf32> to vector<8x32xf32>
    %176 = math.tanh %175 : vector<8x32xf32>
    %177 = vector.extract_strided_slice %174 {offsets = [0, 0], sizes = [8, 32], strides = [1, 1]} : vector<8x96xf32> to vector<8x32xf32>
    %178 = vector.extract_strided_slice %174 {offsets = [0, 32], sizes = [8, 32], strides = [1, 1]} : vector<8x96xf32> to vector<8x32xf32>
    %179 = vector.extract_strided_slice %174 {offsets = [0, 64], sizes = [8, 32], strides = [1, 1]} : vector<8x96xf32> to vector<8x32xf32>
    %180 = arith.mulf %178, %157 : vector<8x32xf32>
    %181 = arith.mulf %177, %176 : vector<8x32xf32>
    %182 = arith.addf %180, %181 : vector<8x32xf32>
    %183 = math.tanh %182 : vector<8x32xf32>
    %184 = arith.mulf %179, %183 : vector<8x32xf32>
    %185 = arith.truncf %184 : vector<8x32xf32> to vector<8x32xbf16>
    %c6_64 = arith.constant 6 : index
    %c0_65 = arith.constant 0 : index
    %c0_66 = arith.constant 0 : index
    %186 = vector.load %arg14[%c6_64, %c0_65, %c0_66] : memref<8x8x32xbf16, #tpu.memory_space<vmem>>, vector<1x8x32xbf16>
    %187 = vector.shape_cast %186 : vector<1x8x32xbf16> to vector<8x32xbf16>
    %188 = vector.shape_cast %185 : vector<8x32xbf16> to vector<1x8x32xbf16>
    tpu.vector_store %arg14[%c6_64, %c0_65, %c0_66], %188 {strides = array<i32>} : memref<8x8x32xbf16, #tpu.memory_space<vmem>>, vector<1x8x32xbf16>,
    %c7 = arith.constant 7 : index
    %c0_67 = arith.constant 0 : index
    %c0_68 = arith.constant 0 : index
    %189 = vector.load %arg13[%c7, %c0_67, %c0_68] : memref<8x8x128xf32, #tpu.memory_space<vmem>>, vector<1x8x128xf32>
    %190 = vector.shape_cast %189 : vector<1x8x128xf32> to vector<8x128xf32>
    %191 = arith.truncf %184 : vector<8x32xf32> to vector<8x32xbf16>
    %cst_69 = arith.constant dense<0.000000e+00> : vector<8x128xf32>
    %192 = tpu.matmul %191, %9, %cst_69 {dimension_numbers = #tpu.dot_dimension_numbers<[1], [0], [0], [1], [0, 0, 1, 1], [], []>} : vector<8x32xbf16>, vector<32x128xbf16>, vector<8x128xf32> -> vector<8x128xf32>
    %193 = arith.addf %190, %192 : vector<8x128xf32>
    %194 = vector.extract_strided_slice %193 {offsets = [0, 0], sizes = [8, 96], strides = [1, 1]} : vector<8x128xf32> to vector<8x96xf32>
    %195 = arith.negf %194 : vector<8x96xf32>
    %196 = math.exp %195 : vector<8x96xf32>
    %cst_70 = arith.constant 1.000000e+00 : f32
    %197 = vector.broadcast %cst_70 : f32 to vector<8x96xf32>
    %198 = arith.addf %197, %196 : vector<8x96xf32>
    %199 = arith.divf %197, %198 : vector<8x96xf32>
    %200 = vector.extract_strided_slice %193 {offsets = [0, 96], sizes = [8, 32], strides = [1, 1]} : vector<8x128xf32> to vector<8x32xf32>
    %201 = math.tanh %200 : vector<8x32xf32>
    %202 = vector.extract_strided_slice %199 {offsets = [0, 0], sizes = [8, 32], strides = [1, 1]} : vector<8x96xf32> to vector<8x32xf32>
    %203 = vector.extract_strided_slice %199 {offsets = [0, 32], sizes = [8, 32], strides = [1, 1]} : vector<8x96xf32> to vector<8x32xf32>
    %204 = vector.extract_strided_slice %199 {offsets = [0, 64], sizes = [8, 32], strides = [1, 1]} : vector<8x96xf32> to vector<8x32xf32>
    %205 = arith.mulf %203, %182 : vector<8x32xf32>
    %206 = arith.mulf %202, %201 : vector<8x32xf32>
    %207 = arith.addf %205, %206 : vector<8x32xf32>
    %208 = math.tanh %207 : vector<8x32xf32>
    %209 = arith.mulf %204, %208 : vector<8x32xf32>
    %210 = arith.truncf %209 : vector<8x32xf32> to vector<8x32xbf16>
    %c7_71 = arith.constant 7 : index
    %c0_72 = arith.constant 0 : index
    %c0_73 = arith.constant 0 : index
    %211 = vector.load %arg14[%c7_71, %c0_72, %c0_73] : memref<8x8x32xbf16, #tpu.memory_space<vmem>>, vector<1x8x32xbf16>
    %212 = vector.shape_cast %211 : vector<1x8x32xbf16> to vector<8x32xbf16>
    %213 = vector.shape_cast %210 : vector<8x32xbf16> to vector<1x8x32xbf16>
    tpu.vector_store %arg14[%c7_71, %c0_72, %c0_73], %213 {strides = array<i32>} : memref<8x8x32xbf16, #tpu.memory_space<vmem>>, vector<1x8x32xbf16>,
    %c0_74 = arith.constant 0 : index
    %c0_75 = arith.constant 0 : index
    %c0_76 = arith.constant 0 : index
    %214 = vector.load %arg14[%c0_74, %c0_75, %c0_76] : memref<8x8x32xbf16, #tpu.memory_space<vmem>>, vector<8x8x32xbf16>
    %215 = vector.shape_cast %214 : vector<8x8x32xbf16> to vector<64x32xbf16>
    %c0_77 = arith.constant 0 : index
    %c0_78 = arith.constant 0 : index
    %216 = vector.load %arg9[%c0_77, %c0_78] : memref<32x128xbf16, #tpu.memory_space<vmem>>, vector<32x128xbf16>
    %cst_79 = arith.constant dense<0.000000e+00> : vector<64x128xf32>
    %217 = tpu.matmul %215, %216, %cst_79 {dimension_numbers = #tpu.dot_dimension_numbers<[1], [0], [0], [1], [0, 0, 1, 1], [], []>} : vector<64x32xbf16>, vector<32x128xbf16>, vector<64x128xf32> -> vector<64x128xf32>
    %c0_80 = arith.constant 0 : index
    %c0_81 = arith.constant 0 : index
    %218 = vector.load %arg11[%c0_80, %c0_81] : memref<1x128xf32, #tpu.memory_space<vmem>>, vector<1x128xf32>
    %219 = vector.broadcast %218 : vector<1x128xf32> to vector<64x128xf32>
    %220 = arith.addf %217, %219 : vector<64x128xf32>
    %221 = vector.shape_cast %220 : vector<64x128xf32> to vector<8x8x128xf32>
    %c0_82 = arith.constant 0 : index
    %c0_83 = arith.constant 0 : index
    %c0_84 = arith.constant 0 : index
    %222 = vector.load %arg13[%c0_82, %c0_83, %c0_84] : memref<8x8x128xf32, #tpu.memory_space<vmem>>, vector<8x8x128xf32>
    tpu.vector_store %arg13[%c0_82, %c0_83, %c0_84], %221 {strides = array<i32>} : memref<8x8x128xf32, #tpu.memory_space<vmem>>, vector<8x8x128xf32>,
    %c0_85 = arith.constant 0 : index
    %c0_86 = arith.constant 0 : index
    %223 = vector.load %arg10[%c0_85, %c0_86] : memref<32x128xbf16, #tpu.memory_space<vmem>>, vector<32x128xbf16>
    %c1_87 = arith.constant 1 : index
    %c0_88 = arith.constant 0 : index
    %c0_89 = arith.constant 0 : index
    %224 = vector.load %arg2[%c1_87, %c0_88, %c0_89] : memref<2x8x32xf32, #tpu.memory_space<vmem>>, vector<1x8x32xf32>
    %225 = vector.shape_cast %224 : vector<1x8x32xf32> to vector<8x32xf32>
    %c1_90 = arith.constant 1 : index
    %c0_91 = arith.constant 0 : index
    %c0_92 = arith.constant 0 : index
    %226 = vector.load %arg3[%c1_90, %c0_91, %c0_92] : memref<2x8x32xf32, #tpu.memory_space<vmem>>, vector<1x8x32xf32>
    %227 = vector.shape_cast %226 : vector<1x8x32xf32> to vector<8x32xf32>
    %c0_93 = arith.constant 0 : index
    %c0_94 = arith.constant 0 : index
    %c0_95 = arith.constant 0 : index
    %228 = vector.load %arg13[%c0_93, %c0_94, %c0_95] : memref<8x8x128xf32, #tpu.memory_space<vmem>>, vector<1x8x128xf32>
    %229 = vector.shape_cast %228 : vector<1x8x128xf32> to vector<8x128xf32>
    %230 = arith.truncf %225 : vector<8x32xf32> to vector<8x32xbf16>
    %cst_96 = arith.constant dense<0.000000e+00> : vector<8x128xf32>
    %231 = tpu.matmul %230, %223, %cst_96 {dimension_numbers = #tpu.dot_dimension_numbers<[1], [0], [0], [1], [0, 0, 1, 1], [], []>} : vector<8x32xbf16>, vector<32x128xbf16>, vector<8x128xf32> -> vector<8x128xf32>
    %232 = arith.addf %229, %231 : vector<8x128xf32>
    %233 = vector.extract_strided_slice %232 {offsets = [0, 0], sizes = [8, 96], strides = [1, 1]} : vector<8x128xf32> to vector<8x96xf32>
    %234 = arith.negf %233 : vector<8x96xf32>
    %235 = math.exp %234 : vector<8x96xf32>
    %cst_97 = arith.constant 1.000000e+00 : f32
    %236 = vector.broadcast %cst_97 : f32 to vector<8x96xf32>
    %237 = arith.addf %236, %235 : vector<8x96xf32>
    %238 = arith.divf %236, %237 : vector<8x96xf32>
    %239 = vector.extract_strided_slice %232 {offsets = [0, 96], sizes = [8, 32], strides = [1, 1]} : vector<8x128xf32> to vector<8x32xf32>
    %240 = math.tanh %239 : vector<8x32xf32>
    %241 = vector.extract_strided_slice %238 {offsets = [0, 0], sizes = [8, 32], strides = [1, 1]} : vector<8x96xf32> to vector<8x32xf32>
    %242 = vector.extract_strided_slice %238 {offsets = [0, 32], sizes = [8, 32], strides = [1, 1]} : vector<8x96xf32> to vector<8x32xf32>
    %243 = vector.extract_strided_slice %238 {offsets = [0, 64], sizes = [8, 32], strides = [1, 1]} : vector<8x96xf32> to vector<8x32xf32>
    %244 = arith.mulf %242, %227 : vector<8x32xf32>
    %245 = arith.mulf %241, %240 : vector<8x32xf32>
    %246 = arith.addf %244, %245 : vector<8x32xf32>
    %247 = math.tanh %246 : vector<8x32xf32>
    %248 = arith.mulf %243, %247 : vector<8x32xf32>
    %c1_98 = arith.constant 1 : index
    %c0_99 = arith.constant 0 : index
    %c0_100 = arith.constant 0 : index
    %249 = vector.load %arg13[%c1_98, %c0_99, %c0_100] : memref<8x8x128xf32, #tpu.memory_space<vmem>>, vector<1x8x128xf32>
    %250 = vector.shape_cast %249 : vector<1x8x128xf32> to vector<8x128xf32>
    %251 = arith.truncf %248 : vector<8x32xf32> to vector<8x32xbf16>
    %cst_101 = arith.constant dense<0.000000e+00> : vector<8x128xf32>
    %252 = tpu.matmul %251, %223, %cst_101 {dimension_numbers = #tpu.dot_dimension_numbers<[1], [0], [0], [1], [0, 0, 1, 1], [], []>} : vector<8x32xbf16>, vector<32x128xbf16>, vector<8x128xf32> -> vector<8x128xf32>
    %253 = arith.addf %250, %252 : vector<8x128xf32>
    %254 = vector.extract_strided_slice %253 {offsets = [0, 0], sizes = [8, 96], strides = [1, 1]} : vector<8x128xf32> to vector<8x96xf32>
    %255 = arith.negf %254 : vector<8x96xf32>
    %256 = math.exp %255 : vector<8x96xf32>
    %cst_102 = arith.constant 1.000000e+00 : f32
    %257 = vector.broadcast %cst_102 : f32 to vector<8x96xf32>
    %258 = arith.addf %257, %256 : vector<8x96xf32>
    %259 = arith.divf %257, %258 : vector<8x96xf32>
    %260 = vector.extract_strided_slice %253 {offsets = [0, 96], sizes = [8, 32], strides = [1, 1]} : vector<8x128xf32> to vector<8x32xf32>
    %261 = math.tanh %260 : vector<8x32xf32>
    %262 = vector.extract_strided_slice %259 {offsets = [0, 0], sizes = [8, 32], strides = [1, 1]} : vector<8x96xf32> to vector<8x32xf32>
    %263 = vector.extract_strided_slice %259 {offsets = [0, 32], sizes = [8, 32], strides = [1, 1]} : vector<8x96xf32> to vector<8x32xf32>
    %264 = vector.extract_strided_slice %259 {offsets = [0, 64], sizes = [8, 32], strides = [1, 1]} : vector<8x96xf32> to vector<8x32xf32>
    %265 = arith.mulf %263, %246 : vector<8x32xf32>
    %266 = arith.mulf %262, %261 : vector<8x32xf32>
    %267 = arith.addf %265, %266 : vector<8x32xf32>
    %268 = math.tanh %267 : vector<8x32xf32>
    %269 = arith.mulf %264, %268 : vector<8x32xf32>
    %c2_103 = arith.constant 2 : index
    %c0_104 = arith.constant 0 : index
    %c0_105 = arith.constant 0 : index
    %270 = vector.load %arg13[%c2_103, %c0_104, %c0_105] : memref<8x8x128xf32, #tpu.memory_space<vmem>>, vector<1x8x128xf32>
    %271 = vector.shape_cast %270 : vector<1x8x128xf32> to vector<8x128xf32>
    %272 = arith.truncf %269 : vector<8x32xf32> to vector<8x32xbf16>
    %cst_106 = arith.constant dense<0.000000e+00> : vector<8x128xf32>
    %273 = tpu.matmul %272, %223, %cst_106 {dimension_numbers = #tpu.dot_dimension_numbers<[1], [0], [0], [1], [0, 0, 1, 1], [], []>} : vector<8x32xbf16>, vector<32x128xbf16>, vector<8x128xf32> -> vector<8x128xf32>
    %274 = arith.addf %271, %273 : vector<8x128xf32>
    %275 = vector.extract_strided_slice %274 {offsets = [0, 0], sizes = [8, 96], strides = [1, 1]} : vector<8x128xf32> to vector<8x96xf32>
    %276 = arith.negf %275 : vector<8x96xf32>
    %277 = math.exp %276 : vector<8x96xf32>
    %cst_107 = arith.constant 1.000000e+00 : f32
    %278 = vector.broadcast %cst_107 : f32 to vector<8x96xf32>
    %279 = arith.addf %278, %277 : vector<8x96xf32>
    %280 = arith.divf %278, %279 : vector<8x96xf32>
    %281 = vector.extract_strided_slice %274 {offsets = [0, 96], sizes = [8, 32], strides = [1, 1]} : vector<8x128xf32> to vector<8x32xf32>
    %282 = math.tanh %281 : vector<8x32xf32>
    %283 = vector.extract_strided_slice %280 {offsets = [0, 0], sizes = [8, 32], strides = [1, 1]} : vector<8x96xf32> to vector<8x32xf32>
    %284 = vector.extract_strided_slice %280 {offsets = [0, 32], sizes = [8, 32], strides = [1, 1]} : vector<8x96xf32> to vector<8x32xf32>
    %285 = vector.extract_strided_slice %280 {offsets = [0, 64], sizes = [8, 32], strides = [1, 1]} : vector<8x96xf32> to vector<8x32xf32>
    %286 = arith.mulf %284, %267 : vector<8x32xf32>
    %287 = arith.mulf %283, %282 : vector<8x32xf32>
    %288 = arith.addf %286, %287 : vector<8x32xf32>
    %289 = math.tanh %288 : vector<8x32xf32>
    %290 = arith.mulf %285, %289 : vector<8x32xf32>
    %c3_108 = arith.constant 3 : index
    %c0_109 = arith.constant 0 : index
    %c0_110 = arith.constant 0 : index
    %291 = vector.load %arg13[%c3_108, %c0_109, %c0_110] : memref<8x8x128xf32, #tpu.memory_space<vmem>>, vector<1x8x128xf32>
    %292 = vector.shape_cast %291 : vector<1x8x128xf32> to vector<8x128xf32>
    %293 = arith.truncf %290 : vector<8x32xf32> to vector<8x32xbf16>
    %cst_111 = arith.constant dense<0.000000e+00> : vector<8x128xf32>
    %294 = tpu.matmul %293, %223, %cst_111 {dimension_numbers = #tpu.dot_dimension_numbers<[1], [0], [0], [1], [0, 0, 1, 1], [], []>} : vector<8x32xbf16>, vector<32x128xbf16>, vector<8x128xf32> -> vector<8x128xf32>
    %295 = arith.addf %292, %294 : vector<8x128xf32>
    %296 = vector.extract_strided_slice %295 {offsets = [0, 0], sizes = [8, 96], strides = [1, 1]} : vector<8x128xf32> to vector<8x96xf32>
    %297 = arith.negf %296 : vector<8x96xf32>
    %298 = math.exp %297 : vector<8x96xf32>
    %cst_112 = arith.constant 1.000000e+00 : f32
    %299 = vector.broadcast %cst_112 : f32 to vector<8x96xf32>
    %300 = arith.addf %299, %298 : vector<8x96xf32>
    %301 = arith.divf %299, %300 : vector<8x96xf32>
    %302 = vector.extract_strided_slice %295 {offsets = [0, 96], sizes = [8, 32], strides = [1, 1]} : vector<8x128xf32> to vector<8x32xf32>
    %303 = math.tanh %302 : vector<8x32xf32>
    %304 = vector.extract_strided_slice %301 {offsets = [0, 0], sizes = [8, 32], strides = [1, 1]} : vector<8x96xf32> to vector<8x32xf32>
    %305 = vector.extract_strided_slice %301 {offsets = [0, 32], sizes = [8, 32], strides = [1, 1]} : vector<8x96xf32> to vector<8x32xf32>
    %306 = vector.extract_strided_slice %301 {offsets = [0, 64], sizes = [8, 32], strides = [1, 1]} : vector<8x96xf32> to vector<8x32xf32>
    %307 = arith.mulf %305, %288 : vector<8x32xf32>
    %308 = arith.mulf %304, %303 : vector<8x32xf32>
    %309 = arith.addf %307, %308 : vector<8x32xf32>
    %310 = math.tanh %309 : vector<8x32xf32>
    %311 = arith.mulf %306, %310 : vector<8x32xf32>
    %c4_113 = arith.constant 4 : index
    %c0_114 = arith.constant 0 : index
    %c0_115 = arith.constant 0 : index
    %312 = vector.load %arg13[%c4_113, %c0_114, %c0_115] : memref<8x8x128xf32, #tpu.memory_space<vmem>>, vector<1x8x128xf32>
    %313 = vector.shape_cast %312 : vector<1x8x128xf32> to vector<8x128xf32>
    %314 = arith.truncf %311 : vector<8x32xf32> to vector<8x32xbf16>
    %cst_116 = arith.constant dense<0.000000e+00> : vector<8x128xf32>
    %315 = tpu.matmul %314, %223, %cst_116 {dimension_numbers = #tpu.dot_dimension_numbers<[1], [0], [0], [1], [0, 0, 1, 1], [], []>} : vector<8x32xbf16>, vector<32x128xbf16>, vector<8x128xf32> -> vector<8x128xf32>
    %316 = arith.addf %313, %315 : vector<8x128xf32>
    %317 = vector.extract_strided_slice %316 {offsets = [0, 0], sizes = [8, 96], strides = [1, 1]} : vector<8x128xf32> to vector<8x96xf32>
    %318 = arith.negf %317 : vector<8x96xf32>
    %319 = math.exp %318 : vector<8x96xf32>
    %cst_117 = arith.constant 1.000000e+00 : f32
    %320 = vector.broadcast %cst_117 : f32 to vector<8x96xf32>
    %321 = arith.addf %320, %319 : vector<8x96xf32>
    %322 = arith.divf %320, %321 : vector<8x96xf32>
    %323 = vector.extract_strided_slice %316 {offsets = [0, 96], sizes = [8, 32], strides = [1, 1]} : vector<8x128xf32> to vector<8x32xf32>
    %324 = math.tanh %323 : vector<8x32xf32>
    %325 = vector.extract_strided_slice %322 {offsets = [0, 0], sizes = [8, 32], strides = [1, 1]} : vector<8x96xf32> to vector<8x32xf32>
    %326 = vector.extract_strided_slice %322 {offsets = [0, 32], sizes = [8, 32], strides = [1, 1]} : vector<8x96xf32> to vector<8x32xf32>
    %327 = vector.extract_strided_slice %322 {offsets = [0, 64], sizes = [8, 32], strides = [1, 1]} : vector<8x96xf32> to vector<8x32xf32>
    %328 = arith.mulf %326, %309 : vector<8x32xf32>
    %329 = arith.mulf %325, %324 : vector<8x32xf32>
    %330 = arith.addf %328, %329 : vector<8x32xf32>
    %331 = math.tanh %330 : vector<8x32xf32>
    %332 = arith.mulf %327, %331 : vector<8x32xf32>
    %c5_118 = arith.constant 5 : index
    %c0_119 = arith.constant 0 : index
    %c0_120 = arith.constant 0 : index
    %333 = vector.load %arg13[%c5_118, %c0_119, %c0_120] : memref<8x8x128xf32, #tpu.memory_space<vmem>>, vector<1x8x128xf32>
    %334 = vector.shape_cast %333 : vector<1x8x128xf32> to vector<8x128xf32>
    %335 = arith.truncf %332 : vector<8x32xf32> to vector<8x32xbf16>
    %cst_121 = arith.constant dense<0.000000e+00> : vector<8x128xf32>
    %336 = tpu.matmul %335, %223, %cst_121 {dimension_numbers = #tpu.dot_dimension_numbers<[1], [0], [0], [1], [0, 0, 1, 1], [], []>} : vector<8x32xbf16>, vector<32x128xbf16>, vector<8x128xf32> -> vector<8x128xf32>
    %337 = arith.addf %334, %336 : vector<8x128xf32>
    %338 = vector.extract_strided_slice %337 {offsets = [0, 0], sizes = [8, 96], strides = [1, 1]} : vector<8x128xf32> to vector<8x96xf32>
    %339 = arith.negf %338 : vector<8x96xf32>
    %340 = math.exp %339 : vector<8x96xf32>
    %cst_122 = arith.constant 1.000000e+00 : f32
    %341 = vector.broadcast %cst_122 : f32 to vector<8x96xf32>
    %342 = arith.addf %341, %340 : vector<8x96xf32>
    %343 = arith.divf %341, %342 : vector<8x96xf32>
    %344 = vector.extract_strided_slice %337 {offsets = [0, 96], sizes = [8, 32], strides = [1, 1]} : vector<8x128xf32> to vector<8x32xf32>
    %345 = math.tanh %344 : vector<8x32xf32>
    %346 = vector.extract_strided_slice %343 {offsets = [0, 0], sizes = [8, 32], strides = [1, 1]} : vector<8x96xf32> to vector<8x32xf32>
    %347 = vector.extract_strided_slice %343 {offsets = [0, 32], sizes = [8, 32], strides = [1, 1]} : vector<8x96xf32> to vector<8x32xf32>
    %348 = vector.extract_strided_slice %343 {offsets = [0, 64], sizes = [8, 32], strides = [1, 1]} : vector<8x96xf32> to vector<8x32xf32>
    %349 = arith.mulf %347, %330 : vector<8x32xf32>
    %350 = arith.mulf %346, %345 : vector<8x32xf32>
    %351 = arith.addf %349, %350 : vector<8x32xf32>
    %352 = math.tanh %351 : vector<8x32xf32>
    %353 = arith.mulf %348, %352 : vector<8x32xf32>
    %c6_123 = arith.constant 6 : index
    %c0_124 = arith.constant 0 : index
    %c0_125 = arith.constant 0 : index
    %354 = vector.load %arg13[%c6_123, %c0_124, %c0_125] : memref<8x8x128xf32, #tpu.memory_space<vmem>>, vector<1x8x128xf32>
    %355 = vector.shape_cast %354 : vector<1x8x128xf32> to vector<8x128xf32>
    %356 = arith.truncf %353 : vector<8x32xf32> to vector<8x32xbf16>
    %cst_126 = arith.constant dense<0.000000e+00> : vector<8x128xf32>
    %357 = tpu.matmul %356, %223, %cst_126 {dimension_numbers = #tpu.dot_dimension_numbers<[1], [0], [0], [1], [0, 0, 1, 1], [], []>} : vector<8x32xbf16>, vector<32x128xbf16>, vector<8x128xf32> -> vector<8x128xf32>
    %358 = arith.addf %355, %357 : vector<8x128xf32>
    %359 = vector.extract_strided_slice %358 {offsets = [0, 0], sizes = [8, 96], strides = [1, 1]} : vector<8x128xf32> to vector<8x96xf32>
    %360 = arith.negf %359 : vector<8x96xf32>
    %361 = math.exp %360 : vector<8x96xf32>
    %cst_127 = arith.constant 1.000000e+00 : f32
    %362 = vector.broadcast %cst_127 : f32 to vector<8x96xf32>
    %363 = arith.addf %362, %361 : vector<8x96xf32>
    %364 = arith.divf %362, %363 : vector<8x96xf32>
    %365 = vector.extract_strided_slice %358 {offsets = [0, 96], sizes = [8, 32], strides = [1, 1]} : vector<8x128xf32> to vector<8x32xf32>
    %366 = math.tanh %365 : vector<8x32xf32>
    %367 = vector.extract_strided_slice %364 {offsets = [0, 0], sizes = [8, 32], strides = [1, 1]} : vector<8x96xf32> to vector<8x32xf32>
    %368 = vector.extract_strided_slice %364 {offsets = [0, 32], sizes = [8, 32], strides = [1, 1]} : vector<8x96xf32> to vector<8x32xf32>
    %369 = vector.extract_strided_slice %364 {offsets = [0, 64], sizes = [8, 32], strides = [1, 1]} : vector<8x96xf32> to vector<8x32xf32>
    %370 = arith.mulf %368, %351 : vector<8x32xf32>
    %371 = arith.mulf %367, %366 : vector<8x32xf32>
    %372 = arith.addf %370, %371 : vector<8x32xf32>
    %373 = math.tanh %372 : vector<8x32xf32>
    %374 = arith.mulf %369, %373 : vector<8x32xf32>
    %c7_128 = arith.constant 7 : index
    %c0_129 = arith.constant 0 : index
    %c0_130 = arith.constant 0 : index
    %375 = vector.load %arg13[%c7_128, %c0_129, %c0_130] : memref<8x8x128xf32, #tpu.memory_space<vmem>>, vector<1x8x128xf32>
    %376 = vector.shape_cast %375 : vector<1x8x128xf32> to vector<8x128xf32>
    %377 = arith.truncf %374 : vector<8x32xf32> to vector<8x32xbf16>
    %cst_131 = arith.constant dense<0.000000e+00> : vector<8x128xf32>
    %378 = tpu.matmul %377, %223, %cst_131 {dimension_numbers = #tpu.dot_dimension_numbers<[1], [0], [0], [1], [0, 0, 1, 1], [], []>} : vector<8x32xbf16>, vector<32x128xbf16>, vector<8x128xf32> -> vector<8x128xf32>
    %379 = arith.addf %376, %378 : vector<8x128xf32>
    %380 = vector.extract_strided_slice %379 {offsets = [0, 0], sizes = [8, 96], strides = [1, 1]} : vector<8x128xf32> to vector<8x96xf32>
    %381 = arith.negf %380 : vector<8x96xf32>
    %382 = math.exp %381 : vector<8x96xf32>
    %cst_132 = arith.constant 1.000000e+00 : f32
    %383 = vector.broadcast %cst_132 : f32 to vector<8x96xf32>
    %384 = arith.addf %383, %382 : vector<8x96xf32>
    %385 = arith.divf %383, %384 : vector<8x96xf32>
    %386 = vector.extract_strided_slice %379 {offsets = [0, 96], sizes = [8, 32], strides = [1, 1]} : vector<8x128xf32> to vector<8x32xf32>
    %387 = math.tanh %386 : vector<8x32xf32>
    %388 = vector.extract_strided_slice %385 {offsets = [0, 0], sizes = [8, 32], strides = [1, 1]} : vector<8x96xf32> to vector<8x32xf32>
    %389 = vector.extract_strided_slice %385 {offsets = [0, 32], sizes = [8, 32], strides = [1, 1]} : vector<8x96xf32> to vector<8x32xf32>
    %390 = vector.extract_strided_slice %385 {offsets = [0, 64], sizes = [8, 32], strides = [1, 1]} : vector<8x96xf32> to vector<8x32xf32>
    %391 = arith.mulf %389, %372 : vector<8x32xf32>
    %392 = arith.mulf %388, %387 : vector<8x32xf32>
    %393 = arith.addf %391, %392 : vector<8x32xf32>
    %394 = math.tanh %393 : vector<8x32xf32>
    %395 = arith.mulf %390, %394 : vector<8x32xf32>
    %cst_133 = arith.constant 0.000000e+00 : f32
    %396 = vector.broadcast %cst_133 : f32 to vector<8x32xf32>
    %397 = arith.maximumf %395, %396 : vector<8x32xf32>
    %398 = arith.truncf %397 : vector<8x32xf32> to vector<8x32xbf16>
    %c0_134 = arith.constant 0 : index
    %c0_135 = arith.constant 0 : index
    %399 = vector.load %arg4[%c0_134, %c0_135] : memref<32x3xbf16, #tpu.memory_space<vmem>>, vector<32x3xbf16>
    %cst_136 = arith.constant dense<0.000000e+00> : vector<8x3xf32>
    %400 = tpu.matmul %398, %399, %cst_136 {dimension_numbers = #tpu.dot_dimension_numbers<[1], [0], [0], [1], [0, 0, 1, 1], [], []>} : vector<8x32xbf16>, vector<32x3xbf16>, vector<8x3xf32> -> vector<8x3xf32>
    %c0_137 = arith.constant 0 : index
    %c0_138 = arith.constant 0 : index
    %401 = vector.load %arg5[%c0_137, %c0_138] : memref<1x3xf32, #tpu.memory_space<vmem>>, vector<1x3xf32>
    %402 = vector.broadcast %401 : vector<1x3xf32> to vector<8x3xf32>
    %403 = arith.addf %400, %402 : vector<8x3xf32>
    %c0_139 = arith.constant 0 : index
    %c0_140 = arith.constant 0 : index
    %404 = vector.load %arg12[%c0_139, %c0_140] : memref<8x3xf32, #tpu.memory_space<vmem>>, vector<8x3xf32>
    tpu.vector_store %arg12[%c0_139, %c0_140], %403 {strides = array<i32>} : memref<8x3xf32, #tpu.memory_space<vmem>>, vector<8x3xf32>,
    return
  }
  func.func @transform_0(%arg0: i32) -> (i32, i32, i32) {
    %c0_i32 = arith.constant 0 : i32
    %c0_i32_0 = arith.constant 0 : i32
    %c0_i32_1 = arith.constant 0 : i32
    return %c0_i32, %arg0, %c0_i32_0 : i32, i32, i32
  }
  func.func @transform_1(%arg0: i32) -> (i32, i32, i32) {
    %c0_i32 = arith.constant 0 : i32
    %c0_i32_0 = arith.constant 0 : i32
    %c0_i32_1 = arith.constant 0 : i32
    return %c0_i32, %arg0, %c0_i32_0 : i32, i32, i32
  }
  func.func @transform_2(%arg0: i32) -> (i32, i32, i32) {
    %c0_i32 = arith.constant 0 : i32
    %c0_i32_0 = arith.constant 0 : i32
    %c0_i32_1 = arith.constant 0 : i32
    return %c0_i32, %arg0, %c0_i32_0 : i32, i32, i32
  }
  func.func @transform_3(%arg0: i32) -> (i32, i32) {
    %c0_i32 = arith.constant 0 : i32
    %c0_i32_0 = arith.constant 0 : i32
    %c0_i32_1 = arith.constant 0 : i32
    return %c0_i32, %c0_i32_0 : i32, i32
  }
  func.func @transform_4(%arg0: i32) -> (i32, i32) {
    %c0_i32 = arith.constant 0 : i32
    %c0_i32_0 = arith.constant 0 : i32
    %c0_i32_1 = arith.constant 0 : i32
    return %c0_i32, %c0_i32_0 : i32, i32
  }
  func.func @transform_5(%arg0: i32) -> (i32, i32) {
    %c0_i32 = arith.constant 0 : i32
    %c0_i32_0 = arith.constant 0 : i32
    %c0_i32_1 = arith.constant 0 : i32
    return %c0_i32, %c0_i32_0 : i32, i32
  }
  func.func @transform_6(%arg0: i32) -> (i32, i32) {
    %c0_i32 = arith.constant 0 : i32
    %c0_i32_0 = arith.constant 0 : i32
    %c0_i32_1 = arith.constant 0 : i32
    return %c0_i32, %c0_i32_0 : i32, i32
  }
  func.func @transform_7(%arg0: i32) -> (i32, i32) {
    %c0_i32 = arith.constant 0 : i32
    %c0_i32_0 = arith.constant 0 : i32
    %c0_i32_1 = arith.constant 0 : i32
    return %c0_i32, %c0_i32_0 : i32, i32
  }
  func.func @transform_8(%arg0: i32) -> (i32, i32) {
    %c0_i32 = arith.constant 0 : i32
    %c0_i32_0 = arith.constant 0 : i32
    %c0_i32_1 = arith.constant 0 : i32
    return %c0_i32, %c0_i32_0 : i32, i32
  }
  func.func @transform_9(%arg0: i32) -> (i32, i32) {
    %c0_i32 = arith.constant 0 : i32
    %c0_i32_0 = arith.constant 0 : i32
    %c0_i32_1 = arith.constant 0 : i32
    return %c0_i32, %c0_i32_0 : i32, i32
  }
  func.func @transform_10(%arg0: i32) -> (i32, i32) {
    %c0_i32 = arith.constant 0 : i32
    %c0_i32_0 = arith.constant 0 : i32
    %c0_i32_1 = arith.constant 0 : i32
    return %c0_i32, %c0_i32_0 : i32, i32
  }
  func.func @transform_11(%arg0: i32) -> (i32, i32) {
    %c0_i32 = arith.constant 0 : i32
    %c0_i32_0 = arith.constant 0 : i32
    return %arg0, %c0_i32 : i32, i32
  }
}

</mosaic_0001>

<llo_original>
// kernel: tpu_custom_call.1
$region0: #{tpu_custom_call.1}
  #allocation0 [shape = 'u32[]', space=smem, size = 0x4, offset = 0x4, fixed_abs, tag = 'smem constant byte address 0x4 - core index']
  #allocation1 [shape = 'u32[144,128]{1,0:T(1,128)}', space=vmem, size = 0x12000, scoped, tag = 'internal scratch']
  #allocation2 [shape = 'f32[8,8,128]{2,1,0:T(8,128)}', space=vmem, size = 0x8000, scoped, tag = 'scratch operand']
  #allocation3 [shape = 'bf16[8,8,32]{2,1,0:T(8,128)(2,1)}', space=vmem, size = 0x4000, scoped, tag = 'scratch operand']
  %s0 = inlined_call_operand.hbm [shape: bf16[8,8,16], index: 0, kind: input, shape index: {}]
  %s1 = inlined_call_operand.vmem [shape: f32[2,8,32], index: 1, kind: input, shape index: {}]
  %s2 = inlined_call_operand.hbm [shape: f32[2,8,32], index: 2, kind: input, shape index: {}]
  %s3 = inlined_call_operand.vmem [shape: bf16[32,3], index: 3, kind: input, shape index: {}]
  %s4 = inlined_call_operand.hbm [shape: f32[1,3], index: 4, kind: input, shape index: {}]
  %s5 = inlined_call_operand.hbm [shape: bf16[16,128], index: 5, kind: input, shape index: {}]
  %s6 = inlined_call_operand.vmem [shape: bf16[32,128], index: 6, kind: input, shape index: {}]
  %s7 = inlined_call_operand.hbm [shape: f32[1,128], index: 7, kind: input, shape index: {}]
  %s8 = inlined_call_operand.vmem [shape: bf16[32,128], index: 8, kind: input, shape index: {}]
  %s9 = inlined_call_operand.hbm [shape: bf16[32,128], index: 9, kind: input, shape index: {}]
  %s10 = inlined_call_operand.vmem [shape: f32[1,128], index: 10, kind: input, shape index: {}]
  %s11 = inlined_call_operand.vmem [shape: f32[8,3], index: 11, kind: output, shape index: {}]
  %s12 = sld [smem:[#allocation0]]
  $region78: #{tpu_custom_call.1} parent=0
    _
  %s14 = ssub.s32 1, %s12
  %s15 = scalar_select 0, %s14, %s12
  $region1: #{tpu_custom_call.1} parent=0
    #allocation4 [shape = 'u8[16384]{0}', space=vmem, size = 0x4000, scoped, tag = 'input window, operand 0, single buffered']
    #allocation5 [shape = 's32[1]{0}', space=sflag, size = 0x4, scoped, tag = 'scoped memory for tpu_custom_call.1']
    #allocation6 [shape = 'u8[8192]{0}', space=vmem, size = 0x2000, scoped, tag = 'input window, operand 2, single buffered']
    #allocation7 [shape = 's32[1]{0}', space=sflag, size = 0x4, scoped, tag = 'scoped memory for tpu_custom_call.1']
    #allocation8 [shape = 'u8[512]{0}', space=vmem, size = 0x400, scoped, tag = 'input window, operand 4, single buffered']
    #allocation9 [shape = 'u8[4096]{0}', space=vmem, size = 0x1000, scoped, tag = 'input window, operand 5, single buffered']
    #allocation10 [shape = 's32[1]{0}', space=sflag, size = 0x4, scoped, tag = 'scoped memory for tpu_custom_call.1']
    #allocation11 [shape = 'u8[512]{0}', space=vmem, size = 0x400, scoped, tag = 'input window, operand 7, single buffered']
    #allocation12 [shape = 'u8[8192]{0}', space=vmem, size = 0x2000, scoped, tag = 'input window, operand 9, single buffered']
    #allocation13 [shape = 's32[1]{0}', space=sflag, size = 0x4, scoped, tag = 'scoped memory for tpu_custom_call.1']
    %16 = vsyncpa [#allocation5], 0
    %17 = vsyncpa [#allocation7], 0
    %18 = vsyncpa [#allocation10], 0
    %19 = vsyncpa [#allocation13], 0
    // Predicated region
    $region2: #{tpu_custom_call.1} parent=1 // pred_check
      _
    $region3: #{tpu_custom_call.1} parent=1 // pred_check_branch
      %21 = sbr.rel (0) target = $region5
    $region4: #{tpu_custom_call.1} parent=1 // pred_region
      %s23 = ssub.s32 512, 512
      %24 = vsyncadd [#allocation5], %s23
      %s25 = sshll.u32 [#allocation4], 4
      %s26 = int_to_ptr.vmem [resolvable:$true] %s25
      %31 = dma.hbm_to_vmem [thread:$0]  %s0, 512, %s26, [#allocation5], 64, 64, 4
    $region5: #{tpu_custom_call.1} parent=1 // pred_fallthru
      _
    // Predicated region
    $region6: #{tpu_custom_call.1} parent=1 // pred_check
      _
    $region7: #{tpu_custom_call.1} parent=1 // pred_check_branch
      %33 = sbr.rel (0) target = $region9
    $region8: #{tpu_custom_call.1} parent=1 // pred_region
      _
    $region9: #{tpu_custom_call.1} parent=1 // pred_fallthru
      _
    // Predicated region
    $region10: #{tpu_custom_call.1} parent=1 // pred_check
      _
    $region11: #{tpu_custom_call.1} parent=1 // pred_check_branch
      %35 = sbr.rel (0) target = $region13
    $region12: #{tpu_custom_call.1} parent=1 // pred_region
      %s37 = ssub.s32 256, 256
      %38 = vsyncadd [#allocation7], %s37
      %s39 = sshll.u32 [#allocation6], 4
      %s40 = int_to_ptr.vmem [resolvable:$true] %s39
      %45 = dma.hbm_to_vmem [thread:$0]  %s2, 256, %s40, [#allocation7], 128, 128, 8
    $region13: #{tpu_custom_call.1} parent=1 // pred_fallthru
      _
    // Predicated region
    $region14: #{tpu_custom_call.1} parent=1 // pred_check
      _
    $region15: #{tpu_custom_call.1} parent=1 // pred_check_branch
      %47 = sbr.rel (0) target = $region17
    $region16: #{tpu_custom_call.1} parent=1 // pred_region
      _
    $region17: #{tpu_custom_call.1} parent=1 // pred_fallthru
      _
    // Predicated region
    $region18: #{tpu_custom_call.1} parent=1 // pred_check
      _
    $region19: #{tpu_custom_call.1} parent=1 // pred_check_branch
      %49 = sbr.rel (0) target = $region21
    $region20: #{tpu_custom_call.1} parent=1 // pred_region
      %s51 = ssub.s32 16, 16
      %52 = vsyncadd [#allocation7], %s51
      %s54 = sshll.u32 [#allocation8], 4
      %s55 = int_to_ptr.vmem [resolvable:$true] %s54
      %57 = dma.hbm_to_vmem [thread:$0]  %s4, 16, %s55, [#allocation7]
    $region21: #{tpu_custom_call.1} parent=1 // pred_fallthru
      _
    // Predicated region
    $region22: #{tpu_custom_call.1} parent=1 // pred_check
      _
    $region23: #{tpu_custom_call.1} parent=1 // pred_check_branch
      %59 = sbr.rel (0) target = $region25
    $region24: #{tpu_custom_call.1} parent=1 // pred_region
      %s61 = ssub.s32 128, 128
      %62 = vsyncadd [#allocation10], %s61
      %s63 = sshll.u32 [#allocation9], 4
      %s64 = int_to_ptr.vmem [resolvable:$true] %s63
      %69 = dma.hbm_to_vmem [thread:$0]  %s5, 128, %s64, [#allocation10], 64, 64, 4
    $region25: #{tpu_custom_call.1} parent=1 // pred_fallthru
      _
    // Predicated region
    $region26: #{tpu_custom_call.1} parent=1 // pred_check
      _
    $region27: #{tpu_custom_call.1} parent=1 // pred_check_branch
      %71 = sbr.rel (0) target = $region29
    $region28: #{tpu_custom_call.1} parent=1 // pred_region
      _
    $region29: #{tpu_custom_call.1} parent=1 // pred_fallthru
      _
    // Predicated region
    $region30: #{tpu_custom_call.1} parent=1 // pred_check
      _
    $region31: #{tpu_custom_call.1} parent=1 // pred_check_branch
      %73 = sbr.rel (0) target = $region33
    $region32: #{tpu_custom_call.1} parent=1 // pred_region
      %s75 = ssub.s32 16, 16
      %76 = vsyncadd [#allocation10], %s75
      %s78 = sshll.u32 [#allocation11], 4
      %s79 = int_to_ptr.vmem [resolvable:$true] %s78
      %81 = dma.hbm_to_vmem [thread:$0]  %s7, 16, %s79, [#allocation10]
    $region33: #{tpu_custom_call.1} parent=1 // pred_fallthru
      _
    // Predicated region
    $region34: #{tpu_custom_call.1} parent=1 // pred_check
      _
    $region35: #{tpu_custom_call.1} parent=1 // pred_check_branch
      %83 = sbr.rel (0) target = $region37
    $region36: #{tpu_custom_call.1} parent=1 // pred_region
      _
    $region37: #{tpu_custom_call.1} parent=1 // pred_fallthru
      _
    // Predicated region
    $region38: #{tpu_custom_call.1} parent=1 // pred_check
      _
    $region39: #{tpu_custom_call.1} parent=1 // pred_check_branch
      %85 = sbr.rel (0) target = $region41
    $region40: #{tpu_custom_call.1} parent=1 // pred_region
      %s87 = ssub.s32 256, 256
      %88 = vsyncadd [#allocation13], %s87
      %s89 = sshll.u32 [#allocation12], 4
      %s90 = int_to_ptr.vmem [resolvable:$true] %s89
      %95 = dma.hbm_to_vmem [thread:$0]  %s9, 256, %s90, [#allocation13], 64, 64, 4
    $region41: #{tpu_custom_call.1} parent=1 // pred_fallthru
      _
    // Predicated region
    $region42: #{tpu_custom_call.1} parent=1 // pred_check
      _
    $region43: #{tpu_custom_call.1} parent=1 // pred_check_branch
      %97 = sbr.rel (0) target = $region45
    $region44: #{tpu_custom_call.1} parent=1 // pred_region
      _
    $region45: #{tpu_custom_call.1} parent=1 // pred_fallthru
      _
    // Predicated region
    $region46: #{tpu_custom_call.1} parent=1 // pred_check
      _
    $region47: #{tpu_custom_call.1} parent=1 // pred_check_branch
      %99 = sbr.rel (0) target = $region49
    $region48: #{tpu_custom_call.1} parent=1 // pred_region
      %100 = dma.done [#allocation5], 512
    $region49: #{tpu_custom_call.1} parent=1 // pred_fallthru
      _
    // Predicated region
    $region50: #{tpu_custom_call.1} parent=1 // pred_check
      _
    $region51: #{tpu_custom_call.1} parent=1 // pred_check_branch
      %102 = sbr.rel (0) target = $region53
    $region52: #{tpu_custom_call.1} parent=1 // pred_region
      %103 = dma.done [#allocation7], 256
    $region53: #{tpu_custom_call.1} parent=1 // pred_fallthru
      _
    // Predicated region
    $region54: #{tpu_custom_call.1} parent=1 // pred_check
      _
    $region55: #{tpu_custom_call.1} parent=1 // pred_check_branch
      %105 = sbr.rel (0) target = $region57
    $region56: #{tpu_custom_call.1} parent=1 // pred_region
      %106 = dma.done [#allocation7], 16
    $region57: #{tpu_custom_call.1} parent=1 // pred_fallthru
      _
    // Predicated region
    $region58: #{tpu_custom_call.1} parent=1 // pred_check
      _
    $region59: #{tpu_custom_call.1} parent=1 // pred_check_branch
      %108 = sbr.rel (0) target = $region61
    $region60: #{tpu_custom_call.1} parent=1 // pred_region
      %109 = dma.done [#allocation10], 128
    $region61: #{tpu_custom_call.1} parent=1 // pred_fallthru
      _
    // Predicated region
    $region62: #{tpu_custom_call.1} parent=1 // pred_check
      _
    $region63: #{tpu_custom_call.1} parent=1 // pred_check_branch
      %111 = sbr.rel (0) target = $region65
    $region64: #{tpu_custom_call.1} parent=1 // pred_region
      %112 = dma.done [#allocation10], 16
    $region65: #{tpu_custom_call.1} parent=1 // pred_fallthru
      _
    // Predicated region
    $region66: #{tpu_custom_call.1} parent=1 // pred_check
      _
    $region67: #{tpu_custom_call.1} parent=1 // pred_check_branch
      %114 = sbr.rel (0) target = $region69
    $region68: #{tpu_custom_call.1} parent=1 // pred_region
      %115 = dma.done [#allocation13], 256
    $region69: #{tpu_custom_call.1} parent=1 // pred_fallthru
      _
    %v117 = vld [vmem:[#allocation4] sm:$0xf]
    %v118 = vld [vmem:[#allocation4 + $0x4] sm:$0xf]
    %v119 = vld [vmem:[#allocation4 + $0x8] sm:$0xf]
    %v120 = vld [vmem:[#allocation4 + $0xc] sm:$0xf]
    %v121 = vld [vmem:[#allocation4 + $0x10] sm:$0xf]
    %v122 = vld [vmem:[#allocation4 + $0x14] sm:$0xf]
    %v123 = vld [vmem:[#allocation4 + $0x18] sm:$0xf]
    %v124 = vld [vmem:[#allocation4 + $0x1c] sm:$0xf]
    %v125 = vld [vmem:[#allocation9] sm:$0xf]
    %v126 = vld [vmem:[#allocation9 + $0x4] sm:$0xf]
    %v127 = vld [vmem:[#allocation11] sm:$0x1]
    %v129 = vlaneseq
    %v130 = vshrl.u32 %v129, 7
    %v131 = vsub.s32 0, %v130
    %v132 = vrot.slane %v127, %v131
    %v142 = vunpack.c.l.b16 %v117
    %v143 = vunpack.c.l.b16 %v118
    %v144 = vunpack.c.l.b16 %v119
    %v145 = vunpack.c.l.b16 %v120
    %v146 = vunpack.c.l.b16 %v121
    %v147 = vunpack.c.l.b16 %v122
    %v148 = vunpack.c.l.b16 %v123
    %v149 = vunpack.c.l.b16 %v124
    %v150 = vpack.c.b16 %v143, %v142
    %v151 = vpack.c.b16 %v145, %v144
    %v152 = vpack.c.b16 %v147, %v146
    %v153 = vpack.c.b16 %v149, %v148
    %v156 = vunpack.c.l.b16 %v125
    %v157 = vunpack.c.l.b16 %v126
    %v158 = vpack.c.b16 %v157, %v156
    %vm160 = vcmask 130048
    %v162 = vsel %vm160, %v150, 0
    %v165 = vsel %vm160, %v151, 0
    %v168 = vsel %vm160, %v152, 0
    %v171 = vsel %vm160, %v153, 0
    %173 = vmatprep.subr.bf16.mxu0 0
    %174 = vmatpush1.bf16.msra.mxu0 %v158
    %175 = vmatprep.subr.bf16.mxu0 0
    %176 = vmatpush1.bf16.msra.mxu0 0
    %177 = vmatprep.subr.bf16.mxu0 0
    %178 = vmatpush1.bf16.msra.mxu0 0
    %179 = vmatprep.subr.bf16.mxu0 0
    %180 = vmatpush1.bf16.msra.mxu0 0
    %181 = vmatprep.subr.bf16.mxu0 0
    %182 = vmatpush1.bf16.msra.mxu0 0
    %183 = vmatprep.subr.bf16.mxu0 0
    %184 = vmatpush1.bf16.msra.mxu0 0
    %185 = vmatprep.subr.bf16.mxu0 0
    %186 = vmatpush1.bf16.msra.mxu0 0
    %187 = vmatprep.subr.bf16.mxu0 0
    %188 = vmatpush1.bf16.msra.mxu0 0
    %189 = vmatprep.subr.bf16.mxu0 0
    %190 = vmatpush1.bf16.msra.mxu0 0
    %191 = vmatprep.subr.bf16.mxu0 0
    %192 = vmatpush1.bf16.msra.mxu0 0
    %193 = vmatprep.subr.bf16.mxu0 0
    %194 = vmatpush1.bf16.msra.mxu0 0
    %195 = vmatprep.subr.bf16.mxu0 0
    %196 = vmatpush1.bf16.msra.mxu0 0
    %197 = vmatprep.subr.bf16.mxu0 0
    %198 = vmatpush1.bf16.msra.mxu0 0
    %199 = vmatprep.subr.bf16.mxu0 0
    %200 = vmatpush1.bf16.msra.mxu0 0
    %201 = vmatprep.subr.bf16.mxu0 0
    %202 = vmatpush1.bf16.msra.mxu0 0
    %203 = vmatprep.subr.bf16.mxu0 0
    %204 = vmatpush1.bf16.msra.mxu0 0
    %205 = vmatprep.mubr.bf16.mxu0 0
    %206 = vmatmul.mubr.bf16.gmra.mrb[0].mxu0 %v162
    %v207 = vpop.f32.mrb[0].mxu0
    %v208 = vadd.f32 %v132, %v207
    %v209 = vpop.f32.mrb[0].mxu0
    %v210 = vpop.f32.mrb[0].mxu0
    %v211 = vadd.f32 %v132, %v210
    %v212 = vpop.f32.mrb[0].mxu0
    %213 = vmatprep.mubr.bf16.mxu0 0
    %214 = vmatmul.mubr.bf16.gmra.mrb[0].mxu0 %v165
    %v215 = vpop.f32.mrb[0].mxu0
    %v216 = vadd.f32 %v132, %v215
    %v217 = vpop.f32.mrb[0].mxu0
    %v218 = vpop.f32.mrb[0].mxu0
    %v219 = vadd.f32 %v132, %v218
    %v220 = vpop.f32.mrb[0].mxu0
    %221 = vmatprep.mubr.bf16.mxu0 0
    %222 = vmatmul.mubr.bf16.gmra.mrb[0].mxu0 %v168
    %v223 = vpop.f32.mrb[0].mxu0
    %v224 = vadd.f32 %v132, %v223
    %v225 = vpop.f32.mrb[0].mxu0
    %v226 = vpop.f32.mrb[0].mxu0
    %v227 = vadd.f32 %v132, %v226
    %v228 = vpop.f32.mrb[0].mxu0
    %229 = vmatprep.mubr.bf16.mxu0 0
    %230 = vmatmul.mubr.bf16.gmra.mrb[0].mxu0 %v171
    %v231 = vpop.f32.mrb[0].mxu0
    %v232 = vadd.f32 %v132, %v231
    %v233 = vpop.f32.mrb[0].mxu0
    %v234 = vpop.f32.mrb[0].mxu0
    %v235 = vadd.f32 %v132, %v234
    %v236 = vpop.f32.mrb[0].mxu0
    %237 = vdwg.mxu0
    %238 = vst [vmem:[#allocation2] sm:$0xff] %v208
    %239 = vst [vmem:[#allocation2 + $0x8] sm:$0xff] %v211
    %240 = vst [vmem:[#allocation2 + $0x10] sm:$0xff] %v216
    %241 = vst [vmem:[#allocation2 + $0x18] sm:$0xff] %v219
    %242 = vst [vmem:[#allocation2 + $0x20] sm:$0xff] %v224
    %243 = vst [vmem:[#allocation2 + $0x28] sm:$0xff] %v227
    %244 = vst [vmem:[#allocation2 + $0x30] sm:$0xff] %v232
    %245 = vst [vmem:[#allocation2 + $0x38] sm:$0xff] %v235
    %v246 = vld [vmem:[%s6] sm:$0xf]
    %v247 = vld [vmem:[%s6 + $0x4] sm:$0xf]
    %v248 = vld [vmem:[%s6 + $0x8] sm:$0xf]
    %v249 = vld [vmem:[%s6 + $0xc] sm:$0xf]
    %v250 = vld [vmem:[%s1] sm:$0xff]
    %v251 = vld [vmem:[#allocation6] sm:$0xff]
    %v252 = vld [vmem:[#allocation2] sm:$0xff]
    %v253 = vpack.c.bf16 %v250, %v250
    %v258 = vunpack.c.l.b16 %v246
    %v259 = vunpack.c.l.b16 %v247
    %v260 = vunpack.c.l.b16 %v248
    %v261 = vunpack.c.l.b16 %v249
    %v262 = vpack.c.b16 %v259, %v258
    %v263 = vpack.c.b16 %v261, %v260
    %vm266 = vcmask 261120
    %v268 = vsel %vm266, %v253, 0
    %270 = vmatprep.subr.bf16.mxu0 0
    %271 = vmatpush1.bf16.msra.mxu0 %v262
    %272 = vmatprep.subr.bf16.mxu0 0
    %273 = vmatpush1.bf16.msra.mxu0 %v263
    %274 = vmatprep.subr.bf16.mxu0 0
    %275 = vmatpush1.bf16.msra.mxu0 0
    %276 = vmatprep.subr.bf16.mxu0 0
    %277 = vmatpush1.bf16.msra.mxu0 0
    %278 = vmatprep.subr.bf16.mxu0 0
    %279 = vmatpush1.bf16.msra.mxu0 0
    %280 = vmatprep.subr.bf16.mxu0 0
    %281 = vmatpush1.bf16.msra.mxu0 0
    %282 = vmatprep.subr.bf16.mxu0 0
    %283 = vmatpush1.bf16.msra.mxu0 0
    %284 = vmatprep.subr.bf16.mxu0 0
    %285 = vmatpush1.bf16.msra.mxu0 0
    %286 = vmatprep.subr.bf16.mxu0 0
    %287 = vmatpush1.bf16.msra.mxu0 0
    %288 = vmatprep.subr.bf16.mxu0 0
    %289 = vmatpush1.bf16.msra.mxu0 0
    %290 = vmatprep.subr.bf16.mxu0 0
    %291 = vmatpush1.bf16.msra.mxu0 0
    %292 = vmatprep.subr.bf16.mxu0 0
    %293 = vmatpush1.bf16.msra.mxu0 0
    %294 = vmatprep.subr.bf16.mxu0 0
    %295 = vmatpush1.bf16.msra.mxu0 0
    %296 = vmatprep.subr.bf16.mxu0 0
    %297 = vmatpush1.bf16.msra.mxu0 0
    %298 = vmatprep.subr.bf16.mxu0 0
    %299 = vmatpush1.bf16.msra.mxu0 0
    %300 = vmatprep.subr.bf16.mxu0 0
    %301 = vmatpush1.bf16.msra.mxu0 0
    %302 = vmatprep.mubr.bf16.mxu0 0
    %303 = vmatmul.mubr.bf16.gmra.mrb[0].mxu0 %v268
    %v304 = vpop.f32.mrb[0].mxu0
    %v305 = vadd.f32 0.0, %v304
    %v306 = vpop.f32.mrb[0].mxu0
    %v307 = vpop.f32.mrb[0].mxu0
    %v308 = vpop.f32.mrb[0].mxu0
    %309 = vdwg.mxu0
    %v310 = vadd.f32 %v252, %v305
    %v311 = vxor.u32 %v310, 2147483648
    %v312 = vmul.f32 %v311, 1.442695
    %v313 = vpow.pop %v312
    %v314 = vadd.f32 %v313, 1.0
    %v315 = vrcp.pop %v314
    %v316 = vmul.f32 1.0, %v315
    %v317 = vtanh.pop %v310
    %319 = vrot.lane.b32.xlu0 %v251, 32
    %v320 = vpop.permute.xlu0 %319
    %v322 = vmul.f32 %v316, %v320
    %324 = vrot.lane.b32.xlu0 %v317, 32
    %v325 = vpop.permute.xlu0 %324
    %v327 = vmul.f32 %v316, %v325
    %329 = vrot.lane.b32.xlu0 %v327, 32
    %v330 = vpop.permute.xlu0 %329
    %v332 = vadd.f32 %v322, %v330
    %v333 = vtanh.pop %v332
    %335 = vrot.lane.b32.xlu0 %v333, 32
    %v336 = vpop.permute.xlu0 %335
    %v338 = vmul.f32 %v316, %v336
    %v339 = vpack.c.bf16 %v338, %v338
    %v341 = vunpack.c.l.b16 %v339
    %v342 = vpack.c.b16 %v341, %v341
    %343 = vrot.lane.b32.xlu0 %v342, 64
    %v344 = vpop.permute.xlu0 %343
    %vm346 = vcmask 257024
    %347 = vst.msk [vmem:[#allocation3] sm:$0xf] %vm346, %v344
    %s348 = scalar_lea.vmem [#allocation2], 8
    %v349 = vld [vmem:[%s348] sm:$0xff]
    %350 = vrot.lane.b32.xlu0 %v339, 64
    %v351 = vpop.permute.xlu0 %350
    %v353 = vsel %vm266, %v351, 0
    %355 = vmatprep.subr.bf16.mxu0 0
    %356 = vmatpush1.bf16.msra.mxu0 %v262
    %357 = vmatprep.subr.bf16.mxu0 0
    %358 = vmatpush1.bf16.msra.mxu0 %v263
    %359 = vmatprep.subr.bf16.mxu0 0
    %360 = vmatpush1.bf16.msra.mxu0 0
    %361 = vmatprep.subr.bf16.mxu0 0
    %362 = vmatpush1.bf16.msra.mxu0 0
    %363 = vmatprep.subr.bf16.mxu0 0
    %364 = vmatpush1.bf16.msra.mxu0 0
    %365 = vmatprep.subr.bf16.mxu0 0
    %366 = vmatpush1.bf16.msra.mxu0 0
    %367 = vmatprep.subr.bf16.mxu0 0
    %368 = vmatpush1.bf16.msra.mxu0 0
    %369 = vmatprep.subr.bf16.mxu0 0
    %370 = vmatpush1.bf16.msra.mxu0 0
    %371 = vmatprep.subr.bf16.mxu0 0
    %372 = vmatpush1.bf16.msra.mxu0 0
    %373 = vmatprep.subr.bf16.mxu0 0
    %374 = vmatpush1.bf16.msra.mxu0 0
    %375 = vmatprep.subr.bf16.mxu0 0
    %376 = vmatpush1.bf16.msra.mxu0 0
    %377 = vmatprep.subr.bf16.mxu0 0
    %378 = vmatpush1.bf16.msra.mxu0 0
    %379 = vmatprep.subr.bf16.mxu0 0
    %380 = vmatpush1.bf16.msra.mxu0 0
    %381 = vmatprep.subr.bf16.mxu0 0
    %382 = vmatpush1.bf16.msra.mxu0 0
    %383 = vmatprep.subr.bf16.mxu0 0
    %384 = vmatpush1.bf16.msra.mxu0 0
    %385 = vmatprep.subr.bf16.mxu0 0
    %386 = vmatpush1.bf16.msra.mxu0 0
    %387 = vmatprep.mubr.bf16.mxu0 0
    %388 = vmatmul.mubr.bf16.gmra.mrb[0].mxu0 %v353
    %v389 = vpop.f32.mrb[0].mxu0
    %v390 = vadd.f32 0.0, %v389
    %v391 = vpop.f32.mrb[0].mxu0
    %v392 = vpop.f32.mrb[0].mxu0
    %v393 = vpop.f32.mrb[0].mxu0
    %394 = vdwg.mxu0
    %v395 = vadd.f32 %v349, %v390
    %v396 = vxor.u32 %v395, 2147483648
    %v397 = vmul.f32 %v396, 1.442695
    %v398 = vpow.pop %v397
    %v399 = vadd.f32 %v398, 1.0
    %v400 = vrcp.pop %v399
    %v401 = vmul.f32 1.0, %v400
    %v402 = vtanh.pop %v395
    %v403 = vmul.f32 %v401, %v332
    %405 = vrot.lane.b32.xlu0 %v402, 32
    %v406 = vpop.permute.xlu0 %405
    %v408 = vmul.f32 %v401, %v406
    %410 = vrot.lane.b32.xlu0 %v408, 32
    %v411 = vpop.permute.xlu0 %410
    %v413 = vadd.f32 %v403, %v411
    %v414 = vtanh.pop %v413
    %416 = vrot.lane.b32.xlu0 %v414, 32
    %v417 = vpop.permute.xlu0 %416
    %v419 = vmul.f32 %v401, %v417
    %v420 = vpack.c.bf16 %v419, %v419
    %v422 = vunpack.c.l.b16 %v420
    %v423 = vpack.c.b16 %v422, %v422
    %424 = vrot.lane.b32.xlu0 %v423, 64
    %v425 = vpop.permute.xlu0 %424
    %s427 = scalar_lea.vmem [#allocation3], 4
    %428 = vst.msk [vmem:[%s427] sm:$0xf] %vm346, %v425
    %s429 = scalar_lea.vmem [#allocation2], 16
    %v430 = vld [vmem:[%s429] sm:$0xff]
    %431 = vrot.lane.b32.xlu0 %v420, 64
    %v432 = vpop.permute.xlu0 %431
    %v434 = vsel %vm266, %v432, 0
    %436 = vmatprep.subr.bf16.mxu0 0
    %437 = vmatpush1.bf16.msra.mxu0 %v262
    %438 = vmatprep.subr.bf16.mxu0 0
    %439 = vmatpush1.bf16.msra.mxu0 %v263
    %440 = vmatprep.subr.bf16.mxu0 0
    %441 = vmatpush1.bf16.msra.mxu0 0
    %442 = vmatprep.subr.bf16.mxu0 0
    %443 = vmatpush1.bf16.msra.mxu0 0
    %444 = vmatprep.subr.bf16.mxu0 0
    %445 = vmatpush1.bf16.msra.mxu0 0
    %446 = vmatprep.subr.bf16.mxu0 0
    %447 = vmatpush1.bf16.msra.mxu0 0
    %448 = vmatprep.subr.bf16.mxu0 0
    %449 = vmatpush1.bf16.msra.mxu0 0
    %450 = vmatprep.subr.bf16.mxu0 0
    %451 = vmatpush1.bf16.msra.mxu0 0
    %452 = vmatprep.subr.bf16.mxu0 0
    %453 = vmatpush1.bf16.msra.mxu0 0
    %454 = vmatprep.subr.bf16.mxu0 0
    %455 = vmatpush1.bf16.msra.mxu0 0
    %456 = vmatprep.subr.bf16.mxu0 0
    %457 = vmatpush1.bf16.msra.mxu0 0
    %458 = vmatprep.subr.bf16.mxu0 0
    %459 = vmatpush1.bf16.msra.mxu0 0
    %460 = vmatprep.subr.bf16.mxu0 0
    %461 = vmatpush1.bf16.msra.mxu0 0
    %462 = vmatprep.subr.bf16.mxu0 0
    %463 = vmatpush1.bf16.msra.mxu0 0
    %464 = vmatprep.subr.bf16.mxu0 0
    %465 = vmatpush1.bf16.msra.mxu0 0
    %466 = vmatprep.subr.bf16.mxu0 0
    %467 = vmatpush1.bf16.msra.mxu0 0
    %468 = vmatprep.mubr.bf16.mxu0 0
    %469 = vmatmul.mubr.bf16.gmra.mrb[0].mxu0 %v434
    %v470 = vpop.f32.mrb[0].mxu0
    %v471 = vadd.f32 0.0, %v470
    %v472 = vpop.f32.mrb[0].mxu0
    %v473 = vpop.f32.mrb[0].mxu0
    %v474 = vpop.f32.mrb[0].mxu0
    %475 = vdwg.mxu0
    %v476 = vadd.f32 %v430, %v471
    %v477 = vxor.u32 %v476, 2147483648
    %v478 = vmul.f32 %v477, 1.442695
    %v479 = vpow.pop %v478
    %v480 = vadd.f32 %v479, 1.0
    %v481 = vrcp.pop %v480
    %v482 = vmul.f32 1.0, %v481
    %v483 = vtanh.pop %v476
    %v484 = vmul.f32 %v482, %v413
    %486 = vrot.lane.b32.xlu0 %v483, 32
    %v487 = vpop.permute.xlu0 %486
    %v489 = vmul.f32 %v482, %v487
    %491 = vrot.lane.b32.xlu0 %v489, 32
    %v492 = vpop.permute.xlu0 %491
    %v494 = vadd.f32 %v484, %v492
    %v495 = vtanh.pop %v494
    %497 = vrot.lane.b32.xlu0 %v495, 32
    %v498 = vpop.permute.xlu0 %497
    %v500 = vmul.f32 %v482, %v498
    %v501 = vpack.c.bf16 %v500, %v500
    %v503 = vunpack.c.l.b16 %v501
    %v504 = vpack.c.b16 %v503, %v503
    %505 = vrot.lane.b32.xlu0 %v504, 64
    %v506 = vpop.permute.xlu0 %505
    %s508 = scalar_lea.vmem [#allocation3], 8
    %509 = vst.msk [vmem:[%s508] sm:$0xf] %vm346, %v506
    %s510 = scalar_lea.vmem [#allocation2], 24
    %v511 = vld [vmem:[%s510] sm:$0xff]
    %512 = vrot.lane.b32.xlu0 %v501, 64
    %v513 = vpop.permute.xlu0 %512
    %v515 = vsel %vm266, %v513, 0
    %517 = vmatprep.subr.bf16.mxu0 0
    %518 = vmatpush1.bf16.msra.mxu0 %v262
    %519 = vmatprep.subr.bf16.mxu0 0
    %520 = vmatpush1.bf16.msra.mxu0 %v263
    %521 = vmatprep.subr.bf16.mxu0 0
    %522 = vmatpush1.bf16.msra.mxu0 0
    %523 = vmatprep.subr.bf16.mxu0 0
    %524 = vmatpush1.bf16.msra.mxu0 0
    %525 = vmatprep.subr.bf16.mxu0 0
    %526 = vmatpush1.bf16.msra.mxu0 0
    %527 = vmatprep.subr.bf16.mxu0 0
    %528 = vmatpush1.bf16.msra.mxu0 0
    %529 = vmatprep.subr.bf16.mxu0 0
    %530 = vmatpush1.bf16.msra.mxu0 0
    %531 = vmatprep.subr.bf16.mxu0 0
    %532 = vmatpush1.bf16.msra.mxu0 0
    %533 = vmatprep.subr.bf16.mxu0 0
    %534 = vmatpush1.bf16.msra.mxu0 0
    %535 = vmatprep.subr.bf16.mxu0 0
    %536 = vmatpush1.bf16.msra.mxu0 0
    %537 = vmatprep.subr.bf16.mxu0 0
    %538 = vmatpush1.bf16.msra.mxu0 0
    %539 = vmatprep.subr.bf16.mxu0 0
    %540 = vmatpush1.bf16.msra.mxu0 0
    %541 = vmatprep.subr.bf16.mxu0 0
    %542 = vmatpush1.bf16.msra.mxu0 0
    %543 = vmatprep.subr.bf16.mxu0 0
    %544 = vmatpush1.bf16.msra.mxu0 0
    %545 = vmatprep.subr.bf16.mxu0 0
    %546 = vmatpush1.bf16.msra.mxu0 0
    %547 = vmatprep.subr.bf16.mxu0 0
    %548 = vmatpush1.bf16.msra.mxu0 0
    %549 = vmatprep.mubr.bf16.mxu0 0
    %550 = vmatmul.mubr.bf16.gmra.mrb[0].mxu0 %v515
    %v551 = vpop.f32.mrb[0].mxu0
    %v552 = vadd.f32 0.0, %v551
    %v553 = vpop.f32.mrb[0].mxu0
    %v554 = vpop.f32.mrb[0].mxu0
    %v555 = vpop.f32.mrb[0].mxu0
    %556 = vdwg.mxu0
    %v557 = vadd.f32 %v511, %v552
    %v558 = vxor.u32 %v557, 2147483648
    %v559 = vmul.f32 %v558, 1.442695
    %v560 = vpow.pop %v559
    %v561 = vadd.f32 %v560, 1.0
    %v562 = vrcp.pop %v561
    %v563 = vmul.f32 1.0, %v562
    %v564 = vtanh.pop %v557
    %v565 = vmul.f32 %v563, %v494
    %567 = vrot.lane.b32.xlu0 %v564, 32
    %v568 = vpop.permute.xlu0 %567
    %v570 = vmul.f32 %v563, %v568
    %572 = vrot.lane.b32.xlu0 %v570, 32
    %v573 = vpop.permute.xlu0 %572
    %v575 = vadd.f32 %v565, %v573
    %v576 = vtanh.pop %v575
    %578 = vrot.lane.b32.xlu0 %v576, 32
    %v579 = vpop.permute.xlu0 %578
    %v581 = vmul.f32 %v563, %v579
    %v582 = vpack.c.bf16 %v581, %v581
    %v584 = vunpack.c.l.b16 %v582
    %v585 = vpack.c.b16 %v584, %v584
    %586 = vrot.lane.b32.xlu0 %v585, 64
    %v587 = vpop.permute.xlu0 %586
    %s589 = scalar_lea.vmem [#allocation3], 12
    %590 = vst.msk [vmem:[%s589] sm:$0xf] %vm346, %v587
    %s591 = scalar_lea.vmem [#allocation2], 32
    %v592 = vld [vmem:[%s591] sm:$0xff]
    %593 = vrot.lane.b32.xlu0 %v582, 64
    %v594 = vpop.permute.xlu0 %593
    %v596 = vsel %vm266, %v594, 0
    %598 = vmatprep.subr.bf16.mxu0 0
    %599 = vmatpush1.bf16.msra.mxu0 %v262
    %600 = vmatprep.subr.bf16.mxu0 0
    %601 = vmatpush1.bf16.msra.mxu0 %v263
    %602 = vmatprep.subr.bf16.mxu0 0
    %603 = vmatpush1.bf16.msra.mxu0 0
    %604 = vmatprep.subr.bf16.mxu0 0
    %605 = vmatpush1.bf16.msra.mxu0 0
    %606 = vmatprep.subr.bf16.mxu0 0
    %607 = vmatpush1.bf16.msra.mxu0 0
    %608 = vmatprep.subr.bf16.mxu0 0
    %609 = vmatpush1.bf16.msra.mxu0 0
    %610 = vmatprep.subr.bf16.mxu0 0
    %611 = vmatpush1.bf16.msra.mxu0 0
    %612 = vmatprep.subr.bf16.mxu0 0
    %613 = vmatpush1.bf16.msra.mxu0 0
    %614 = vmatprep.subr.bf16.mxu0 0
    %615 = vmatpush1.bf16.msra.mxu0 0
    %616 = vmatprep.subr.bf16.mxu0 0
    %617 = vmatpush1.bf16.msra.mxu0 0
    %618 = vmatprep.subr.bf16.mxu0 0
    %619 = vmatpush1.bf16.msra.mxu0 0
    %620 = vmatprep.subr.bf16.mxu0 0
    %621 = vmatpush1.bf16.msra.mxu0 0
    %622 = vmatprep.subr.bf16.mxu0 0
    %623 = vmatpush1.bf16.msra.mxu0 0
    %624 = vmatprep.subr.bf16.mxu0 0
    %625 = vmatpush1.bf16.msra.mxu0 0
    %626 = vmatprep.subr.bf16.mxu0 0
    %627 = vmatpush1.bf16.msra.mxu0 0
    %628 = vmatprep.subr.bf16.mxu0 0
    %629 = vmatpush1.bf16.msra.mxu0 0
    %630 = vmatprep.mubr.bf16.mxu0 0
    %631 = vmatmul.mubr.bf16.gmra.mrb[0].mxu0 %v596
    %v632 = vpop.f32.mrb[0].mxu0
    %v633 = vadd.f32 0.0, %v632
    %v634 = vpop.f32.mrb[0].mxu0
    %v635 = vpop.f32.mrb[0].mxu0
    %v636 = vpop.f32.mrb[0].mxu0
    %637 = vdwg.mxu0
    %v638 = vadd.f32 %v592, %v633
    %v639 = vxor.u32 %v638, 2147483648
    %v640 = vmul.f32 %v639, 1.442695
    %v641 = vpow.pop %v640
    %v642 = vadd.f32 %v641, 1.0
    %v643 = vrcp.pop %v642
    %v644 = vmul.f32 1.0, %v643
    %v645 = vtanh.pop %v638
    %v646 = vmul.f32 %v644, %v575
    %648 = vrot.lane.b32.xlu0 %v645, 32
    %v649 = vpop.permute.xlu0 %648
    %v651 = vmul.f32 %v644, %v649
    %653 = vrot.lane.b32.xlu0 %v651, 32
    %v654 = vpop.permute.xlu0 %653
    %v656 = vadd.f32 %v646, %v654
    %v657 = vtanh.pop %v656
    %659 = vrot.lane.b32.xlu0 %v657, 32
    %v660 = vpop.permute.xlu0 %659
    %v662 = vmul.f32 %v644, %v660
    %v663 = vpack.c.bf16 %v662, %v662
    %v665 = vunpack.c.l.b16 %v663
    %v666 = vpack.c.b16 %v665, %v665
    %667 = vrot.lane.b32.xlu0 %v666, 64
    %v668 = vpop.permute.xlu0 %667
    %s670 = scalar_lea.vmem [#allocation3], 16
    %671 = vst.msk [vmem:[%s670] sm:$0xf] %vm346, %v668
    %s672 = scalar_lea.vmem [#allocation2], 40
    %v673 = vld [vmem:[%s672] sm:$0xff]
    %674 = vrot.lane.b32.xlu0 %v663, 64
    %v675 = vpop.permute.xlu0 %674
    %v677 = vsel %vm266, %v675, 0
    %679 = vmatprep.subr.bf16.mxu0 0
    %680 = vmatpush1.bf16.msra.mxu0 %v262
    %681 = vmatprep.subr.bf16.mxu0 0
    %682 = vmatpush1.bf16.msra.mxu0 %v263
    %683 = vmatprep.subr.bf16.mxu0 0
    %684 = vmatpush1.bf16.msra.mxu0 0
    %685 = vmatprep.subr.bf16.mxu0 0
    %686 = vmatpush1.bf16.msra.mxu0 0
    %687 = vmatprep.subr.bf16.mxu0 0
    %688 = vmatpush1.bf16.msra.mxu0 0
    %689 = vmatprep.subr.bf16.mxu0 0
    %690 = vmatpush1.bf16.msra.mxu0 0
    %691 = vmatprep.subr.bf16.mxu0 0
    %692 = vmatpush1.bf16.msra.mxu0 0
    %693 = vmatprep.subr.bf16.mxu0 0
    %694 = vmatpush1.bf16.msra.mxu0 0
    %695 = vmatprep.subr.bf16.mxu0 0
    %696 = vmatpush1.bf16.msra.mxu0 0
    %697 = vmatprep.subr.bf16.mxu0 0
    %698 = vmatpush1.bf16.msra.mxu0 0
    %699 = vmatprep.subr.bf16.mxu0 0
    %700 = vmatpush1.bf16.msra.mxu0 0
    %701 = vmatprep.subr.bf16.mxu0 0
    %702 = vmatpush1.bf16.msra.mxu0 0
    %703 = vmatprep.subr.bf16.mxu0 0
    %704 = vmatpush1.bf16.msra.mxu0 0
    %705 = vmatprep.subr.bf16.mxu0 0
    %706 = vmatpush1.bf16.msra.mxu0 0
    %707 = vmatprep.subr.bf16.mxu0 0
    %708 = vmatpush1.bf16.msra.mxu0 0
    %709 = vmatprep.subr.bf16.mxu0 0
    %710 = vmatpush1.bf16.msra.mxu0 0
    %711 = vmatprep.mubr.bf16.mxu0 0
    %712 = vmatmul.mubr.bf16.gmra.mrb[0].mxu0 %v677
    %v713 = vpop.f32.mrb[0].mxu0
    %v714 = vadd.f32 0.0, %v713
    %v715 = vpop.f32.mrb[0].mxu0
    %v716 = vpop.f32.mrb[0].mxu0
    %v717 = vpop.f32.mrb[0].mxu0
    %718 = vdwg.mxu0
    %v719 = vadd.f32 %v673, %v714
    %v720 = vxor.u32 %v719, 2147483648
    %v721 = vmul.f32 %v720, 1.442695
    %v722 = vpow.pop %v721
    %v723 = vadd.f32 %v722, 1.0
    %v724 = vrcp.pop %v723
    %v725 = vmul.f32 1.0, %v724
    %v726 = vtanh.pop %v719
    %v727 = vmul.f32 %v725, %v656
    %729 = vrot.lane.b32.xlu0 %v726, 32
    %v730 = vpop.permute.xlu0 %729
    %v732 = vmul.f32 %v725, %v730
    %734 = vrot.lane.b32.xlu0 %v732, 32
    %v735 = vpop.permute.xlu0 %734
    %v737 = vadd.f32 %v727, %v735
    %v738 = vtanh.pop %v737
    %740 = vrot.lane.b32.xlu0 %v738, 32
    %v741 = vpop.permute.xlu0 %740
    %v743 = vmul.f32 %v725, %v741
    %v744 = vpack.c.bf16 %v743, %v743
    %v746 = vunpack.c.l.b16 %v744
    %v747 = vpack.c.b16 %v746, %v746
    %748 = vrot.lane.b32.xlu0 %v747, 64
    %v749 = vpop.permute.xlu0 %748
    %s751 = scalar_lea.vmem [#allocation3], 20
    %752 = vst.msk [vmem:[%s751] sm:$0xf] %vm346, %v749
    %s753 = scalar_lea.vmem [#allocation2], 48
    %v754 = vld [vmem:[%s753] sm:$0xff]
    %755 = vrot.lane.b32.xlu0 %v744, 64
    %v756 = vpop.permute.xlu0 %755
    %v758 = vsel %vm266, %v756, 0
    %760 = vmatprep.subr.bf16.mxu0 0
    %761 = vmatpush1.bf16.msra.mxu0 %v262
    %762 = vmatprep.subr.bf16.mxu0 0
    %763 = vmatpush1.bf16.msra.mxu0 %v263
    %764 = vmatprep.subr.bf16.mxu0 0
    %765 = vmatpush1.bf16.msra.mxu0 0
    %766 = vmatprep.subr.bf16.mxu0 0
    %767 = vmatpush1.bf16.msra.mxu0 0
    %768 = vmatprep.subr.bf16.mxu0 0
    %769 = vmatpush1.bf16.msra.mxu0 0
    %770 = vmatprep.subr.bf16.mxu0 0
    %771 = vmatpush1.bf16.msra.mxu0 0
    %772 = vmatprep.subr.bf16.mxu0 0
    %773 = vmatpush1.bf16.msra.mxu0 0
    %774 = vmatprep.subr.bf16.mxu0 0
    %775 = vmatpush1.bf16.msra.mxu0 0
    %776 = vmatprep.subr.bf16.mxu0 0
    %777 = vmatpush1.bf16.msra.mxu0 0
    %778 = vmatprep.subr.bf16.mxu0 0
    %779 = vmatpush1.bf16.msra.mxu0 0
    %780 = vmatprep.subr.bf16.mxu0 0
    %781 = vmatpush1.bf16.msra.mxu0 0
    %782 = vmatprep.subr.bf16.mxu0 0
    %783 = vmatpush1.bf16.msra.mxu0 0
    %784 = vmatprep.subr.bf16.mxu0 0
    %785 = vmatpush1.bf16.msra.mxu0 0
    %786 = vmatprep.subr.bf16.mxu0 0
    %787 = vmatpush1.bf16.msra.mxu0 0
    %788 = vmatprep.subr.bf16.mxu0 0
    %789 = vmatpush1.bf16.msra.mxu0 0
    %790 = vmatprep.subr.bf16.mxu0 0
    %791 = vmatpush1.bf16.msra.mxu0 0
    %792 = vmatprep.mubr.bf16.mxu0 0
    %793 = vmatmul.mubr.bf16.gmra.mrb[0].mxu0 %v758
    %v794 = vpop.f32.mrb[0].mxu0
    %v795 = vadd.f32 0.0, %v794
    %v796 = vpop.f32.mrb[0].mxu0
    %v797 = vpop.f32.mrb[0].mxu0
    %v798 = vpop.f32.mrb[0].mxu0
    %799 = vdwg.mxu0
    %v800 = vadd.f32 %v754, %v795
    %v801 = vxor.u32 %v800, 2147483648
    %v802 = vmul.f32 %v801, 1.442695
    %v803 = vpow.pop %v802
    %v804 = vadd.f32 %v803, 1.0
    %v805 = vrcp.pop %v804
    %v806 = vmul.f32 1.0, %v805
    %v807 = vtanh.pop %v800
    %v808 = vmul.f32 %v806, %v737
    %810 = vrot.lane.b32.xlu0 %v807, 32
    %v811 = vpop.permute.xlu0 %810
    %v813 = vmul.f32 %v806, %v811
    %815 = vrot.lane.b32.xlu0 %v813, 32
    %v816 = vpop.permute.xlu0 %815
    %v818 = vadd.f32 %v808, %v816
    %v819 = vtanh.pop %v818
    %821 = vrot.lane.b32.xlu0 %v819, 32
    %v822 = vpop.permute.xlu0 %821
    %v824 = vmul.f32 %v806, %v822
    %v825 = vpack.c.bf16 %v824, %v824
    %v827 = vunpack.c.l.b16 %v825
    %v828 = vpack.c.b16 %v827, %v827
    %829 = vrot.lane.b32.xlu0 %v828, 64
    %v830 = vpop.permute.xlu0 %829
    %s832 = scalar_lea.vmem [#allocation3], 24
    %833 = vst.msk [vmem:[%s832] sm:$0xf] %vm346, %v830
    %s834 = scalar_lea.vmem [#allocation2], 56
    %v835 = vld [vmem:[%s834] sm:$0xff]
    %836 = vrot.lane.b32.xlu0 %v825, 64
    %v837 = vpop.permute.xlu0 %836
    %v839 = vsel %vm266, %v837, 0
    %841 = vmatprep.subr.bf16.mxu0 0
    %842 = vmatpush1.bf16.msra.mxu0 %v262
    %843 = vmatprep.subr.bf16.mxu0 0
    %844 = vmatpush1.bf16.msra.mxu0 %v263
    %845 = vmatprep.subr.bf16.mxu0 0
    %846 = vmatpush1.bf16.msra.mxu0 0
    %847 = vmatprep.subr.bf16.mxu0 0
    %848 = vmatpush1.bf16.msra.mxu0 0
    %849 = vmatprep.subr.bf16.mxu0 0
    %850 = vmatpush1.bf16.msra.mxu0 0
    %851 = vmatprep.subr.bf16.mxu0 0
    %852 = vmatpush1.bf16.msra.mxu0 0
    %853 = vmatprep.subr.bf16.mxu0 0
    %854 = vmatpush1.bf16.msra.mxu0 0
    %855 = vmatprep.subr.bf16.mxu0 0
    %856 = vmatpush1.bf16.msra.mxu0 0
    %857 = vmatprep.subr.bf16.mxu0 0
    %858 = vmatpush1.bf16.msra.mxu0 0
    %859 = vmatprep.subr.bf16.mxu0 0
    %860 = vmatpush1.bf16.msra.mxu0 0
    %861 = vmatprep.subr.bf16.mxu0 0
    %862 = vmatpush1.bf16.msra.mxu0 0
    %863 = vmatprep.subr.bf16.mxu0 0
    %864 = vmatpush1.bf16.msra.mxu0 0
    %865 = vmatprep.subr.bf16.mxu0 0
    %866 = vmatpush1.bf16.msra.mxu0 0
    %867 = vmatprep.subr.bf16.mxu0 0
    %868 = vmatpush1.bf16.msra.mxu0 0
    %869 = vmatprep.subr.bf16.mxu0 0
    %870 = vmatpush1.bf16.msra.mxu0 0
    %871 = vmatprep.subr.bf16.mxu0 0
    %872 = vmatpush1.bf16.msra.mxu0 0
    %873 = vmatprep.mubr.bf16.mxu0 0
    %874 = vmatmul.mubr.bf16.gmra.mrb[0].mxu0 %v839
    %v875 = vpop.f32.mrb[0].mxu0
    %v876 = vadd.f32 0.0, %v875
    %v877 = vpop.f32.mrb[0].mxu0
    %v878 = vpop.f32.mrb[0].mxu0
    %v879 = vpop.f32.mrb[0].mxu0
    %880 = vdwg.mxu0
    %v881 = vadd.f32 %v835, %v876
    %v882 = vxor.u32 %v881, 2147483648
    %v883 = vmul.f32 %v882, 1.442695
    %v884 = vpow.pop %v883
    %v885 = vadd.f32 %v884, 1.0
    %v886 = vrcp.pop %v885
    %v887 = vmul.f32 1.0, %v886
    %v888 = vtanh.pop %v881
    %v889 = vmul.f32 %v887, %v818
    %891 = vrot.lane.b32.xlu0 %v888, 32
    %v892 = vpop.permute.xlu0 %891
    %v894 = vmul.f32 %v887, %v892
    %896 = vrot.lane.b32.xlu0 %v894, 32
    %v897 = vpop.permute.xlu0 %896
    %v899 = vadd.f32 %v889, %v897
    %v900 = vtanh.pop %v899
    %902 = vrot.lane.b32.xlu0 %v900, 32
    %v903 = vpop.permute.xlu0 %902
    %v905 = vmul.f32 %v887, %v903
    %v906 = vpack.c.bf16 %v905, %v905
    %v908 = vunpack.c.l.b16 %v906
    %v909 = vpack.c.b16 %v908, %v908
    %910 = vrot.lane.b32.xlu0 %v909, 64
    %v911 = vpop.permute.xlu0 %910
    %s913 = scalar_lea.vmem [#allocation3], 28
    %914 = vst.msk [vmem:[%s913] sm:$0xf] %vm346, %v911
    %v915 = vld [vmem:[#allocation3] sm:$0xf]
    %v916 = vld [vmem:[#allocation3 + $0x4] sm:$0xf]
    %v917 = vld [vmem:[#allocation3 + $0x8] sm:$0xf]
    %v918 = vld [vmem:[#allocation3 + $0xc] sm:$0xf]
    %v919 = vld [vmem:[#allocation3 + $0x10] sm:$0xf]
    %v920 = vld [vmem:[#allocation3 + $0x14] sm:$0xf]
    %v921 = vld [vmem:[#allocation3 + $0x18] sm:$0xf]
    %v922 = vld [vmem:[#allocation3 + $0x1c] sm:$0xf]
    %v923 = vld [vmem:[%s8] sm:$0xf]
    %v924 = vld [vmem:[%s8 + $0x4] sm:$0xf]
    %v925 = vld [vmem:[%s8 + $0x8] sm:$0xf]
    %v926 = vld [vmem:[%s8 + $0xc] sm:$0xf]
    %v927 = vld [vmem:[%s10] sm:$0x1]
    %v929 = vlaneseq
    %v930 = vshrl.u32 %v929, 7
    %v931 = vsub.s32 0, %v930
    %v932 = vrot.slane %v927, %v931
    %v942 = vunpack.c.l.b16 %v915
    %v943 = vunpack.c.l.b16 %v916
    %v944 = vunpack.c.l.b16 %v917
    %v945 = vunpack.c.l.b16 %v918
    %v946 = vunpack.c.l.b16 %v919
    %v947 = vunpack.c.l.b16 %v920
    %v948 = vunpack.c.l.b16 %v921
    %v949 = vunpack.c.l.b16 %v922
    %v950 = vpack.c.b16 %v943, %v942
    %v951 = vpack.c.b16 %v945, %v944
    %v952 = vpack.c.b16 %v947, %v946
    %v953 = vpack.c.b16 %v949, %v948
    %v958 = vunpack.c.l.b16 %v923
    %v959 = vunpack.c.l.b16 %v924
    %v960 = vunpack.c.l.b16 %v925
    %v961 = vunpack.c.l.b16 %v926
    %v962 = vpack.c.b16 %v959, %v958
    %v963 = vpack.c.b16 %v961, %v960
    %v967 = vsel %vm266, %v950, 0
    %v970 = vsel %vm266, %v951, 0
    %v973 = vsel %vm266, %v952, 0
    %v976 = vsel %vm266, %v953, 0
    %978 = vmatprep.subr.bf16.mxu0 0
    %979 = vmatpush1.bf16.msra.mxu0 %v962
    %980 = vmatprep.subr.bf16.mxu0 0
    %981 = vmatpush1.bf16.msra.mxu0 %v963
    %982 = vmatprep.subr.bf16.mxu0 0
    %983 = vmatpush1.bf16.msra.mxu0 0
    %984 = vmatprep.subr.bf16.mxu0 0
    %985 = vmatpush1.bf16.msra.mxu0 0
    %986 = vmatprep.subr.bf16.mxu0 0
    %987 = vmatpush1.bf16.msra.mxu0 0
    %988 = vmatprep.subr.bf16.mxu0 0
    %989 = vmatpush1.bf16.msra.mxu0 0
    %990 = vmatprep.subr.bf16.mxu0 0
    %991 = vmatpush1.bf16.msra.mxu0 0
    %992 = vmatprep.subr.bf16.mxu0 0
    %993 = vmatpush1.bf16.msra.mxu0 0
    %994 = vmatprep.subr.bf16.mxu0 0
    %995 = vmatpush1.bf16.msra.mxu0 0
    %996 = vmatprep.subr.bf16.mxu0 0
    %997 = vmatpush1.bf16.msra.mxu0 0
    %998 = vmatprep.subr.bf16.mxu0 0
    %999 = vmatpush1.bf16.msra.mxu0 0
    %1000 = vmatprep.subr.bf16.mxu0 0
    %1001 = vmatpush1.bf16.msra.mxu0 0
    %1002 = vmatprep.subr.bf16.mxu0 0
    %1003 = vmatpush1.bf16.msra.mxu0 0
    %1004 = vmatprep.subr.bf16.mxu0 0
    %1005 = vmatpush1.bf16.msra.mxu0 0
    %1006 = vmatprep.subr.bf16.mxu0 0
    %1007 = vmatpush1.bf16.msra.mxu0 0
    %1008 = vmatprep.subr.bf16.mxu0 0
    %1009 = vmatpush1.bf16.msra.mxu0 0
    %1010 = vmatprep.mubr.bf16.mxu0 0
    %1011 = vmatmul.mubr.bf16.gmra.mrb[0].mxu0 %v967
    %v1012 = vpop.f32.mrb[0].mxu0
    %v1013 = vadd.f32 %v932, %v1012
    %v1014 = vpop.f32.mrb[0].mxu0
    %v1015 = vpop.f32.mrb[0].mxu0
    %v1016 = vadd.f32 %v932, %v1015
    %v1017 = vpop.f32.mrb[0].mxu0
    %1018 = vmatprep.mubr.bf16.mxu0 0
    %1019 = vmatmul.mubr.bf16.gmra.mrb[0].mxu0 %v970
    %v1020 = vpop.f32.mrb[0].mxu0
    %v1021 = vadd.f32 %v932, %v1020
    %v1022 = vpop.f32.mrb[0].mxu0
    %v1023 = vpop.f32.mrb[0].mxu0
    %v1024 = vadd.f32 %v932, %v1023
    %v1025 = vpop.f32.mrb[0].mxu0
    %1026 = vmatprep.mubr.bf16.mxu0 0
    %1027 = vmatmul.mubr.bf16.gmra.mrb[0].mxu0 %v973
    %v1028 = vpop.f32.mrb[0].mxu0
    %v1029 = vadd.f32 %v932, %v1028
    %v1030 = vpop.f32.mrb[0].mxu0
    %v1031 = vpop.f32.mrb[0].mxu0
    %v1032 = vadd.f32 %v932, %v1031
    %v1033 = vpop.f32.mrb[0].mxu0
    %1034 = vmatprep.mubr.bf16.mxu0 0
    %1035 = vmatmul.mubr.bf16.gmra.mrb[0].mxu0 %v976
    %v1036 = vpop.f32.mrb[0].mxu0
    %v1037 = vadd.f32 %v932, %v1036
    %v1038 = vpop.f32.mrb[0].mxu0
    %v1039 = vpop.f32.mrb[0].mxu0
    %v1040 = vadd.f32 %v932, %v1039
    %v1041 = vpop.f32.mrb[0].mxu0
    %1042 = vdwg.mxu0
    %1043 = vst [vmem:[#allocation2] sm:$0xff] %v1013
    %1044 = vst [vmem:[#allocation2 + $0x8] sm:$0xff] %v1016
    %1045 = vst [vmem:[#allocation2 + $0x10] sm:$0xff] %v1021
    %1046 = vst [vmem:[#allocation2 + $0x18] sm:$0xff] %v1024
    %1047 = vst [vmem:[#allocation2 + $0x20] sm:$0xff] %v1029
    %1048 = vst [vmem:[#allocation2 + $0x28] sm:$0xff] %v1032
    %1049 = vst [vmem:[#allocation2 + $0x30] sm:$0xff] %v1037
    %1050 = vst [vmem:[#allocation2 + $0x38] sm:$0xff] %v1040
    %v1051 = vld [vmem:[#allocation12] sm:$0xf]
    %v1052 = vld [vmem:[#allocation12 + $0x4] sm:$0xf]
    %v1053 = vld [vmem:[#allocation12 + $0x8] sm:$0xf]
    %v1054 = vld [vmem:[#allocation12 + $0xc] sm:$0xf]
    %s1055 = scalar_lea.vmem %s1, 8
    %v1056 = vld [vmem:[%s1055] sm:$0xff]
    %s1057 = scalar_lea.vmem [#allocation6], 8
    %v1058 = vld [vmem:[%s1057] sm:$0xff]
    %v1059 = vld [vmem:[#allocation2] sm:$0xff]
    %v1060 = vpack.c.bf16 %v1056, %v1056
    %v1065 = vunpack.c.l.b16 %v1051
    %v1066 = vunpack.c.l.b16 %v1052
    %v1067 = vunpack.c.l.b16 %v1053
    %v1068 = vunpack.c.l.b16 %v1054
    %v1069 = vpack.c.b16 %v1066, %v1065
    %v1070 = vpack.c.b16 %v1068, %v1067
    %v1074 = vsel %vm266, %v1060, 0
    %1076 = vmatprep.subr.bf16.mxu0 0
    %1077 = vmatpush1.bf16.msra.mxu0 %v1069
    %1078 = vmatprep.subr.bf16.mxu0 0
    %1079 = vmatpush1.bf16.msra.mxu0 %v1070
    %1080 = vmatprep.subr.bf16.mxu0 0
    %1081 = vmatpush1.bf16.msra.mxu0 0
    %1082 = vmatprep.subr.bf16.mxu0 0
    %1083 = vmatpush1.bf16.msra.mxu0 0
    %1084 = vmatprep.subr.bf16.mxu0 0
    %1085 = vmatpush1.bf16.msra.mxu0 0
    %1086 = vmatprep.subr.bf16.mxu0 0
    %1087 = vmatpush1.bf16.msra.mxu0 0
    %1088 = vmatprep.subr.bf16.mxu0 0
    %1089 = vmatpush1.bf16.msra.mxu0 0
    %1090 = vmatprep.subr.bf16.mxu0 0
    %1091 = vmatpush1.bf16.msra.mxu0 0
    %1092 = vmatprep.subr.bf16.mxu0 0
    %1093 = vmatpush1.bf16.msra.mxu0 0
    %1094 = vmatprep.subr.bf16.mxu0 0
    %1095 = vmatpush1.bf16.msra.mxu0 0
    %1096 = vmatprep.subr.bf16.mxu0 0
    %1097 = vmatpush1.bf16.msra.mxu0 0
    %1098 = vmatprep.subr.bf16.mxu0 0
    %1099 = vmatpush1.bf16.msra.mxu0 0
    %1100 = vmatprep.subr.bf16.mxu0 0
    %1101 = vmatpush1.bf16.msra.mxu0 0
    %1102 = vmatprep.subr.bf16.mxu0 0
    %1103 = vmatpush1.bf16.msra.mxu0 0
    %1104 = vmatprep.subr.bf16.mxu0 0
    %1105 = vmatpush1.bf16.msra.mxu0 0
    %1106 = vmatprep.subr.bf16.mxu0 0
    %1107 = vmatpush1.bf16.msra.mxu0 0
    %1108 = vmatprep.mubr.bf16.mxu0 0
    %1109 = vmatmul.mubr.bf16.gmra.mrb[0].mxu0 %v1074
    %v1110 = vpop.f32.mrb[0].mxu0
    %v1111 = vadd.f32 0.0, %v1110
    %v1112 = vpop.f32.mrb[0].mxu0
    %v1113 = vpop.f32.mrb[0].mxu0
    %v1114 = vpop.f32.mrb[0].mxu0
    %1115 = vdwg.mxu0
    %v1116 = vadd.f32 %v1059, %v1111
    %v1117 = vxor.u32 %v1116, 2147483648
    %v1118 = vmul.f32 %v1117, 1.442695
    %v1119 = vpow.pop %v1118
    %v1120 = vadd.f32 %v1119, 1.0
    %v1121 = vrcp.pop %v1120
    %v1122 = vmul.f32 1.0, %v1121
    %v1123 = vtanh.pop %v1116
    %1125 = vrot.lane.b32.xlu0 %v1058, 32
    %v1126 = vpop.permute.xlu0 %1125
    %v1128 = vmul.f32 %v1122, %v1126
    %1130 = vrot.lane.b32.xlu0 %v1123, 32
    %v1131 = vpop.permute.xlu0 %1130
    %v1133 = vmul.f32 %v1122, %v1131
    %1135 = vrot.lane.b32.xlu0 %v1133, 32
    %v1136 = vpop.permute.xlu0 %1135
    %v1138 = vadd.f32 %v1128, %v1136
    %v1139 = vtanh.pop %v1138
    %1141 = vrot.lane.b32.xlu0 %v1139, 32
    %v1142 = vpop.permute.xlu0 %1141
    %v1144 = vmul.f32 %v1122, %v1142
    %v1145 = vld [vmem:[%s348] sm:$0xff]
    %v1146 = vpack.c.bf16 %v1144, %v1144
    %1148 = vrot.lane.b32.xlu0 %v1146, 64
    %v1149 = vpop.permute.xlu0 %1148
    %v1151 = vsel %vm266, %v1149, 0
    %1153 = vmatprep.subr.bf16.mxu0 0
    %1154 = vmatpush1.bf16.msra.mxu0 %v1069
    %1155 = vmatprep.subr.bf16.mxu0 0
    %1156 = vmatpush1.bf16.msra.mxu0 %v1070
    %1157 = vmatprep.subr.bf16.mxu0 0
    %1158 = vmatpush1.bf16.msra.mxu0 0
    %1159 = vmatprep.subr.bf16.mxu0 0
    %1160 = vmatpush1.bf16.msra.mxu0 0
    %1161 = vmatprep.subr.bf16.mxu0 0
    %1162 = vmatpush1.bf16.msra.mxu0 0
    %1163 = vmatprep.subr.bf16.mxu0 0
    %1164 = vmatpush1.bf16.msra.mxu0 0
    %1165 = vmatprep.subr.bf16.mxu0 0
    %1166 = vmatpush1.bf16.msra.mxu0 0
    %1167 = vmatprep.subr.bf16.mxu0 0
    %1168 = vmatpush1.bf16.msra.mxu0 0
    %1169 = vmatprep.subr.bf16.mxu0 0
    %1170 = vmatpush1.bf16.msra.mxu0 0
    %1171 = vmatprep.subr.bf16.mxu0 0
    %1172 = vmatpush1.bf16.msra.mxu0 0
    %1173 = vmatprep.subr.bf16.mxu0 0
    %1174 = vmatpush1.bf16.msra.mxu0 0
    %1175 = vmatprep.subr.bf16.mxu0 0
    %1176 = vmatpush1.bf16.msra.mxu0 0
    %1177 = vmatprep.subr.bf16.mxu0 0
    %1178 = vmatpush1.bf16.msra.mxu0 0
    %1179 = vmatprep.subr.bf16.mxu0 0
    %1180 = vmatpush1.bf16.msra.mxu0 0
    %1181 = vmatprep.subr.bf16.mxu0 0
    %1182 = vmatpush1.bf16.msra.mxu0 0
    %1183 = vmatprep.subr.bf16.mxu0 0
    %1184 = vmatpush1.bf16.msra.mxu0 0
    %1185 = vmatprep.mubr.bf16.mxu0 0
    %1186 = vmatmul.mubr.bf16.gmra.mrb[0].mxu0 %v1151
    %v1187 = vpop.f32.mrb[0].mxu0
    %v1188 = vadd.f32 0.0, %v1187
    %v1189 = vpop.f32.mrb[0].mxu0
    %v1190 = vpop.f32.mrb[0].mxu0
    %v1191 = vpop.f32.mrb[0].mxu0
    %1192 = vdwg.mxu0
    %v1193 = vadd.f32 %v1145, %v1188
    %v1194 = vxor.u32 %v1193, 2147483648
    %v1195 = vmul.f32 %v1194, 1.442695
    %v1196 = vpow.pop %v1195
    %v1197 = vadd.f32 %v1196, 1.0
    %v1198 = vrcp.pop %v1197
    %v1199 = vmul.f32 1.0, %v1198
    %v1200 = vtanh.pop %v1193
    %v1201 = vmul.f32 %v1199, %v1138
    %1203 = vrot.lane.b32.xlu0 %v1200, 32
    %v1204 = vpop.permute.xlu0 %1203
    %v1206 = vmul.f32 %v1199, %v1204
    %1208 = vrot.lane.b32.xlu0 %v1206, 32
    %v1209 = vpop.permute.xlu0 %1208
    %v1211 = vadd.f32 %v1201, %v1209
    %v1212 = vtanh.pop %v1211
    %1214 = vrot.lane.b32.xlu0 %v1212, 32
    %v1215 = vpop.permute.xlu0 %1214
    %v1217 = vmul.f32 %v1199, %v1215
    %v1218 = vld [vmem:[%s429] sm:$0xff]
    %v1219 = vpack.c.bf16 %v1217, %v1217
    %1221 = vrot.lane.b32.xlu0 %v1219, 64
    %v1222 = vpop.permute.xlu0 %1221
    %v1224 = vsel %vm266, %v1222, 0
    %1226 = vmatprep.subr.bf16.mxu0 0
    %1227 = vmatpush1.bf16.msra.mxu0 %v1069
    %1228 = vmatprep.subr.bf16.mxu0 0
    %1229 = vmatpush1.bf16.msra.mxu0 %v1070
    %1230 = vmatprep.subr.bf16.mxu0 0
    %1231 = vmatpush1.bf16.msra.mxu0 0
    %1232 = vmatprep.subr.bf16.mxu0 0
    %1233 = vmatpush1.bf16.msra.mxu0 0
    %1234 = vmatprep.subr.bf16.mxu0 0
    %1235 = vmatpush1.bf16.msra.mxu0 0
    %1236 = vmatprep.subr.bf16.mxu0 0
    %1237 = vmatpush1.bf16.msra.mxu0 0
    %1238 = vmatprep.subr.bf16.mxu0 0
    %1239 = vmatpush1.bf16.msra.mxu0 0
    %1240 = vmatprep.subr.bf16.mxu0 0
    %1241 = vmatpush1.bf16.msra.mxu0 0
    %1242 = vmatprep.subr.bf16.mxu0 0
    %1243 = vmatpush1.bf16.msra.mxu0 0
    %1244 = vmatprep.subr.bf16.mxu0 0
    %1245 = vmatpush1.bf16.msra.mxu0 0
    %1246 = vmatprep.subr.bf16.mxu0 0
    %1247 = vmatpush1.bf16.msra.mxu0 0
    %1248 = vmatprep.subr.bf16.mxu0 0
    %1249 = vmatpush1.bf16.msra.mxu0 0
    %1250 = vmatprep.subr.bf16.mxu0 0
    %1251 = vmatpush1.bf16.msra.mxu0 0
    %1252 = vmatprep.subr.bf16.mxu0 0
    %1253 = vmatpush1.bf16.msra.mxu0 0
    %1254 = vmatprep.subr.bf16.mxu0 0
    %1255 = vmatpush1.bf16.msra.mxu0 0
    %1256 = vmatprep.subr.bf16.mxu0 0
    %1257 = vmatpush1.bf16.msra.mxu0 0
    %1258 = vmatprep.mubr.bf16.mxu0 0
    %1259 = vmatmul.mubr.bf16.gmra.mrb[0].mxu0 %v1224
    %v1260 = vpop.f32.mrb[0].mxu0
    %v1261 = vadd.f32 0.0, %v1260
    %v1262 = vpop.f32.mrb[0].mxu0
    %v1263 = vpop.f32.mrb[0].mxu0
    %v1264 = vpop.f32.mrb[0].mxu0
    %1265 = vdwg.mxu0
    %v1266 = vadd.f32 %v1218, %v1261
    %v1267 = vxor.u32 %v1266, 2147483648
    %v1268 = vmul.f32 %v1267, 1.442695
    %v1269 = vpow.pop %v1268
    %v1270 = vadd.f32 %v1269, 1.0
    %v1271 = vrcp.pop %v1270
    %v1272 = vmul.f32 1.0, %v1271
    %v1273 = vtanh.pop %v1266
    %v1274 = vmul.f32 %v1272, %v1211
    %1276 = vrot.lane.b32.xlu0 %v1273, 32
    %v1277 = vpop.permute.xlu0 %1276
    %v1279 = vmul.f32 %v1272, %v1277
    %1281 = vrot.lane.b32.xlu0 %v1279, 32
    %v1282 = vpop.permute.xlu0 %1281
    %v1284 = vadd.f32 %v1274, %v1282
    %v1285 = vtanh.pop %v1284
    %1287 = vrot.lane.b32.xlu0 %v1285, 32
    %v1288 = vpop.permute.xlu0 %1287
    %v1290 = vmul.f32 %v1272, %v1288
    %v1291 = vld [vmem:[%s510] sm:$0xff]
    %v1292 = vpack.c.bf16 %v1290, %v1290
    %1294 = vrot.lane.b32.xlu0 %v1292, 64
    %v1295 = vpop.permute.xlu0 %1294
    %v1297 = vsel %vm266, %v1295, 0
    %1299 = vmatprep.subr.bf16.mxu0 0
    %1300 = vmatpush1.bf16.msra.mxu0 %v1069
    %1301 = vmatprep.subr.bf16.mxu0 0
    %1302 = vmatpush1.bf16.msra.mxu0 %v1070
    %1303 = vmatprep.subr.bf16.mxu0 0
    %1304 = vmatpush1.bf16.msra.mxu0 0
    %1305 = vmatprep.subr.bf16.mxu0 0
    %1306 = vmatpush1.bf16.msra.mxu0 0
    %1307 = vmatprep.subr.bf16.mxu0 0
    %1308 = vmatpush1.bf16.msra.mxu0 0
    %1309 = vmatprep.subr.bf16.mxu0 0
    %1310 = vmatpush1.bf16.msra.mxu0 0
    %1311 = vmatprep.subr.bf16.mxu0 0
    %1312 = vmatpush1.bf16.msra.mxu0 0
    %1313 = vmatprep.subr.bf16.mxu0 0
    %1314 = vmatpush1.bf16.msra.mxu0 0
    %1315 = vmatprep.subr.bf16.mxu0 0
    %1316 = vmatpush1.bf16.msra.mxu0 0
    %1317 = vmatprep.subr.bf16.mxu0 0
    %1318 = vmatpush1.bf16.msra.mxu0 0
    %1319 = vmatprep.subr.bf16.mxu0 0
    %1320 = vmatpush1.bf16.msra.mxu0 0
    %1321 = vmatprep.subr.bf16.mxu0 0
    %1322 = vmatpush1.bf16.msra.mxu0 0
    %1323 = vmatprep.subr.bf16.mxu0 0
    %1324 = vmatpush1.bf16.msra.mxu0 0
    %1325 = vmatprep.subr.bf16.mxu0 0
    %1326 = vmatpush1.bf16.msra.mxu0 0
    %1327 = vmatprep.subr.bf16.mxu0 0
    %1328 = vmatpush1.bf16.msra.mxu0 0
    %1329 = vmatprep.subr.bf16.mxu0 0
    %1330 = vmatpush1.bf16.msra.mxu0 0
    %1331 = vmatprep.mubr.bf16.mxu0 0
    %1332 = vmatmul.mubr.bf16.gmra.mrb[0].mxu0 %v1297
    %v1333 = vpop.f32.mrb[0].mxu0
    %v1334 = vadd.f32 0.0, %v1333
    %v1335 = vpop.f32.mrb[0].mxu0
    %v1336 = vpop.f32.mrb[0].mxu0
    %v1337 = vpop.f32.mrb[0].mxu0
    %1338 = vdwg.mxu0
    %v1339 = vadd.f32 %v1291, %v1334
    %v1340 = vxor.u32 %v1339, 2147483648
    %v1341 = vmul.f32 %v1340, 1.442695
    %v1342 = vpow.pop %v1341
    %v1343 = vadd.f32 %v1342, 1.0
    %v1344 = vrcp.pop %v1343
    %v1345 = vmul.f32 1.0, %v1344
    %v1346 = vtanh.pop %v1339
    %v1347 = vmul.f32 %v1345, %v1284
    %1349 = vrot.lane.b32.xlu0 %v1346, 32
    %v1350 = vpop.permute.xlu0 %1349
    %v1352 = vmul.f32 %v1345, %v1350
    %1354 = vrot.lane.b32.xlu0 %v1352, 32
    %v1355 = vpop.permute.xlu0 %1354
    %v1357 = vadd.f32 %v1347, %v1355
    %v1358 = vtanh.pop %v1357
    %1360 = vrot.lane.b32.xlu0 %v1358, 32
    %v1361 = vpop.permute.xlu0 %1360
    %v1363 = vmul.f32 %v1345, %v1361
    %v1364 = vld [vmem:[%s591] sm:$0xff]
    %v1365 = vpack.c.bf16 %v1363, %v1363
    %1367 = vrot.lane.b32.xlu0 %v1365, 64
    %v1368 = vpop.permute.xlu0 %1367
    %v1370 = vsel %vm266, %v1368, 0
    %1372 = vmatprep.subr.bf16.mxu0 0
    %1373 = vmatpush1.bf16.msra.mxu0 %v1069
    %1374 = vmatprep.subr.bf16.mxu0 0
    %1375 = vmatpush1.bf16.msra.mxu0 %v1070
    %1376 = vmatprep.subr.bf16.mxu0 0
    %1377 = vmatpush1.bf16.msra.mxu0 0
    %1378 = vmatprep.subr.bf16.mxu0 0
    %1379 = vmatpush1.bf16.msra.mxu0 0
    %1380 = vmatprep.subr.bf16.mxu0 0
    %1381 = vmatpush1.bf16.msra.mxu0 0
    %1382 = vmatprep.subr.bf16.mxu0 0
    %1383 = vmatpush1.bf16.msra.mxu0 0
    %1384 = vmatprep.subr.bf16.mxu0 0
    %1385 = vmatpush1.bf16.msra.mxu0 0
    %1386 = vmatprep.subr.bf16.mxu0 0
    %1387 = vmatpush1.bf16.msra.mxu0 0
    %1388 = vmatprep.subr.bf16.mxu0 0
    %1389 = vmatpush1.bf16.msra.mxu0 0
    %1390 = vmatprep.subr.bf16.mxu0 0
    %1391 = vmatpush1.bf16.msra.mxu0 0
    %1392 = vmatprep.subr.bf16.mxu0 0
    %1393 = vmatpush1.bf16.msra.mxu0 0
    %1394 = vmatprep.subr.bf16.mxu0 0
    %1395 = vmatpush1.bf16.msra.mxu0 0
    %1396 = vmatprep.subr.bf16.mxu0 0
    %1397 = vmatpush1.bf16.msra.mxu0 0
    %1398 = vmatprep.subr.bf16.mxu0 0
    %1399 = vmatpush1.bf16.msra.mxu0 0
    %1400 = vmatprep.subr.bf16.mxu0 0
    %1401 = vmatpush1.bf16.msra.mxu0 0
    %1402 = vmatprep.subr.bf16.mxu0 0
    %1403 = vmatpush1.bf16.msra.mxu0 0
    %1404 = vmatprep.mubr.bf16.mxu0 0
    %1405 = vmatmul.mubr.bf16.gmra.mrb[0].mxu0 %v1370
    %v1406 = vpop.f32.mrb[0].mxu0
    %v1407 = vadd.f32 0.0, %v1406
    %v1408 = vpop.f32.mrb[0].mxu0
    %v1409 = vpop.f32.mrb[0].mxu0
    %v1410 = vpop.f32.mrb[0].mxu0
    %1411 = vdwg.mxu0
    %v1412 = vadd.f32 %v1364, %v1407
    %v1413 = vxor.u32 %v1412, 2147483648
    %v1414 = vmul.f32 %v1413, 1.442695
    %v1415 = vpow.pop %v1414
    %v1416 = vadd.f32 %v1415, 1.0
    %v1417 = vrcp.pop %v1416
    %v1418 = vmul.f32 1.0, %v1417
    %v1419 = vtanh.pop %v1412
    %v1420 = vmul.f32 %v1418, %v1357
    %1422 = vrot.lane.b32.xlu0 %v1419, 32
    %v1423 = vpop.permute.xlu0 %1422
    %v1425 = vmul.f32 %v1418, %v1423
    %1427 = vrot.lane.b32.xlu0 %v1425, 32
    %v1428 = vpop.permute.xlu0 %1427
    %v1430 = vadd.f32 %v1420, %v1428
    %v1431 = vtanh.pop %v1430
    %1433 = vrot.lane.b32.xlu0 %v1431, 32
    %v1434 = vpop.permute.xlu0 %1433
    %v1436 = vmul.f32 %v1418, %v1434
    %v1437 = vld [vmem:[%s672] sm:$0xff]
    %v1438 = vpack.c.bf16 %v1436, %v1436
    %1440 = vrot.lane.b32.xlu0 %v1438, 64
    %v1441 = vpop.permute.xlu0 %1440
    %v1443 = vsel %vm266, %v1441, 0
    %1445 = vmatprep.subr.bf16.mxu0 0
    %1446 = vmatpush1.bf16.msra.mxu0 %v1069
    %1447 = vmatprep.subr.bf16.mxu0 0
    %1448 = vmatpush1.bf16.msra.mxu0 %v1070
    %1449 = vmatprep.subr.bf16.mxu0 0
    %1450 = vmatpush1.bf16.msra.mxu0 0
    %1451 = vmatprep.subr.bf16.mxu0 0
    %1452 = vmatpush1.bf16.msra.mxu0 0
    %1453 = vmatprep.subr.bf16.mxu0 0
    %1454 = vmatpush1.bf16.msra.mxu0 0
    %1455 = vmatprep.subr.bf16.mxu0 0
    %1456 = vmatpush1.bf16.msra.mxu0 0
    %1457 = vmatprep.subr.bf16.mxu0 0
    %1458 = vmatpush1.bf16.msra.mxu0 0
    %1459 = vmatprep.subr.bf16.mxu0 0
    %1460 = vmatpush1.bf16.msra.mxu0 0
    %1461 = vmatprep.subr.bf16.mxu0 0
    %1462 = vmatpush1.bf16.msra.mxu0 0
    %1463 = vmatprep.subr.bf16.mxu0 0
    %1464 = vmatpush1.bf16.msra.mxu0 0
    %1465 = vmatprep.subr.bf16.mxu0 0
    %1466 = vmatpush1.bf16.msra.mxu0 0
    %1467 = vmatprep.subr.bf16.mxu0 0
    %1468 = vmatpush1.bf16.msra.mxu0 0
    %1469 = vmatprep.subr.bf16.mxu0 0
    %1470 = vmatpush1.bf16.msra.mxu0 0
    %1471 = vmatprep.subr.bf16.mxu0 0
    %1472 = vmatpush1.bf16.msra.mxu0 0
    %1473 = vmatprep.subr.bf16.mxu0 0
    %1474 = vmatpush1.bf16.msra.mxu0 0
    %1475 = vmatprep.subr.bf16.mxu0 0
    %1476 = vmatpush1.bf16.msra.mxu0 0
    %1477 = vmatprep.mubr.bf16.mxu0 0
    %1478 = vmatmul.mubr.bf16.gmra.mrb[0].mxu0 %v1443
    %v1479 = vpop.f32.mrb[0].mxu0
    %v1480 = vadd.f32 0.0, %v1479
    %v1481 = vpop.f32.mrb[0].mxu0
    %v1482 = vpop.f32.mrb[0].mxu0
    %v1483 = vpop.f32.mrb[0].mxu0
    %1484 = vdwg.mxu0
    %v1485 = vadd.f32 %v1437, %v1480
    %v1486 = vxor.u32 %v1485, 2147483648
    %v1487 = vmul.f32 %v1486, 1.442695
    %v1488 = vpow.pop %v1487
    %v1489 = vadd.f32 %v1488, 1.0
    %v1490 = vrcp.pop %v1489
    %v1491 = vmul.f32 1.0, %v1490
    %v1492 = vtanh.pop %v1485
    %v1493 = vmul.f32 %v1491, %v1430
    %1495 = vrot.lane.b32.xlu0 %v1492, 32
    %v1496 = vpop.permute.xlu0 %1495
    %v1498 = vmul.f32 %v1491, %v1496
    %1500 = vrot.lane.b32.xlu0 %v1498, 32
    %v1501 = vpop.permute.xlu0 %1500
    %v1503 = vadd.f32 %v1493, %v1501
    %v1504 = vtanh.pop %v1503
    %1506 = vrot.lane.b32.xlu0 %v1504, 32
    %v1507 = vpop.permute.xlu0 %1506
    %v1509 = vmul.f32 %v1491, %v1507
    %v1510 = vld [vmem:[%s753] sm:$0xff]
    %v1511 = vpack.c.bf16 %v1509, %v1509
    %1513 = vrot.lane.b32.xlu0 %v1511, 64
    %v1514 = vpop.permute.xlu0 %1513
    %v1516 = vsel %vm266, %v1514, 0
    %1518 = vmatprep.subr.bf16.mxu0 0
    %1519 = vmatpush1.bf16.msra.mxu0 %v1069
    %1520 = vmatprep.subr.bf16.mxu0 0
    %1521 = vmatpush1.bf16.msra.mxu0 %v1070
    %1522 = vmatprep.subr.bf16.mxu0 0
    %1523 = vmatpush1.bf16.msra.mxu0 0
    %1524 = vmatprep.subr.bf16.mxu0 0
    %1525 = vmatpush1.bf16.msra.mxu0 0
    %1526 = vmatprep.subr.bf16.mxu0 0
    %1527 = vmatpush1.bf16.msra.mxu0 0
    %1528 = vmatprep.subr.bf16.mxu0 0
    %1529 = vmatpush1.bf16.msra.mxu0 0
    %1530 = vmatprep.subr.bf16.mxu0 0
    %1531 = vmatpush1.bf16.msra.mxu0 0
    %1532 = vmatprep.subr.bf16.mxu0 0
    %1533 = vmatpush1.bf16.msra.mxu0 0
    %1534 = vmatprep.subr.bf16.mxu0 0
    %1535 = vmatpush1.bf16.msra.mxu0 0
    %1536 = vmatprep.subr.bf16.mxu0 0
    %1537 = vmatpush1.bf16.msra.mxu0 0
    %1538 = vmatprep.subr.bf16.mxu0 0
    %1539 = vmatpush1.bf16.msra.mxu0 0
    %1540 = vmatprep.subr.bf16.mxu0 0
    %1541 = vmatpush1.bf16.msra.mxu0 0
    %1542 = vmatprep.subr.bf16.mxu0 0
    %1543 = vmatpush1.bf16.msra.mxu0 0
    %1544 = vmatprep.subr.bf16.mxu0 0
    %1545 = vmatpush1.bf16.msra.mxu0 0
    %1546 = vmatprep.subr.bf16.mxu0 0
    %1547 = vmatpush1.bf16.msra.mxu0 0
    %1548 = vmatprep.subr.bf16.mxu0 0
    %1549 = vmatpush1.bf16.msra.mxu0 0
    %1550 = vmatprep.mubr.bf16.mxu0 0
    %1551 = vmatmul.mubr.bf16.gmra.mrb[0].mxu0 %v1516
    %v1552 = vpop.f32.mrb[0].mxu0
    %v1553 = vadd.f32 0.0, %v1552
    %v1554 = vpop.f32.mrb[0].mxu0
    %v1555 = vpop.f32.mrb[0].mxu0
    %v1556 = vpop.f32.mrb[0].mxu0
    %1557 = vdwg.mxu0
    %v1558 = vadd.f32 %v1510, %v1553
    %v1559 = vxor.u32 %v1558, 2147483648
    %v1560 = vmul.f32 %v1559, 1.442695
    %v1561 = vpow.pop %v1560
    %v1562 = vadd.f32 %v1561, 1.0
    %v1563 = vrcp.pop %v1562
    %v1564 = vmul.f32 1.0, %v1563
    %v1565 = vtanh.pop %v1558
    %v1566 = vmul.f32 %v1564, %v1503
    %1568 = vrot.lane.b32.xlu0 %v1565, 32
    %v1569 = vpop.permute.xlu0 %1568
    %v1571 = vmul.f32 %v1564, %v1569
    %1573 = vrot.lane.b32.xlu0 %v1571, 32
    %v1574 = vpop.permute.xlu0 %1573
    %v1576 = vadd.f32 %v1566, %v1574
    %v1577 = vtanh.pop %v1576
    %1579 = vrot.lane.b32.xlu0 %v1577, 32
    %v1580 = vpop.permute.xlu0 %1579
    %v1582 = vmul.f32 %v1564, %v1580
    %v1583 = vld [vmem:[%s834] sm:$0xff]
    %v1584 = vpack.c.bf16 %v1582, %v1582
    %1586 = vrot.lane.b32.xlu0 %v1584, 64
    %v1587 = vpop.permute.xlu0 %1586
    %v1589 = vsel %vm266, %v1587, 0
    %1591 = vmatprep.subr.bf16.mxu0 0
    %1592 = vmatpush1.bf16.msra.mxu0 %v1069
    %1593 = vmatprep.subr.bf16.mxu0 0
    %1594 = vmatpush1.bf16.msra.mxu0 %v1070
    %1595 = vmatprep.subr.bf16.mxu0 0
    %1596 = vmatpush1.bf16.msra.mxu0 0
    %1597 = vmatprep.subr.bf16.mxu0 0
    %1598 = vmatpush1.bf16.msra.mxu0 0
    %1599 = vmatprep.subr.bf16.mxu0 0
    %1600 = vmatpush1.bf16.msra.mxu0 0
    %1601 = vmatprep.subr.bf16.mxu0 0
    %1602 = vmatpush1.bf16.msra.mxu0 0
    %1603 = vmatprep.subr.bf16.mxu0 0
    %1604 = vmatpush1.bf16.msra.mxu0 0
    %1605 = vmatprep.subr.bf16.mxu0 0
    %1606 = vmatpush1.bf16.msra.mxu0 0
    %1607 = vmatprep.subr.bf16.mxu0 0
    %1608 = vmatpush1.bf16.msra.mxu0 0
    %1609 = vmatprep.subr.bf16.mxu0 0
    %1610 = vmatpush1.bf16.msra.mxu0 0
    %1611 = vmatprep.subr.bf16.mxu0 0
    %1612 = vmatpush1.bf16.msra.mxu0 0
    %1613 = vmatprep.subr.bf16.mxu0 0
    %1614 = vmatpush1.bf16.msra.mxu0 0
    %1615 = vmatprep.subr.bf16.mxu0 0
    %1616 = vmatpush1.bf16.msra.mxu0 0
    %1617 = vmatprep.subr.bf16.mxu0 0
    %1618 = vmatpush1.bf16.msra.mxu0 0
    %1619 = vmatprep.subr.bf16.mxu0 0
    %1620 = vmatpush1.bf16.msra.mxu0 0
    %1621 = vmatprep.subr.bf16.mxu0 0
    %1622 = vmatpush1.bf16.msra.mxu0 0
    %1623 = vmatprep.mubr.bf16.mxu0 0
    %1624 = vmatmul.mubr.bf16.gmra.mrb[0].mxu0 %v1589
    %v1625 = vpop.f32.mrb[0].mxu0
    %v1626 = vadd.f32 0.0, %v1625
    %v1627 = vpop.f32.mrb[0].mxu0
    %v1628 = vpop.f32.mrb[0].mxu0
    %v1629 = vpop.f32.mrb[0].mxu0
    %1630 = vdwg.mxu0
    %v1631 = vadd.f32 %v1583, %v1626
    %v1632 = vxor.u32 %v1631, 2147483648
    %v1633 = vmul.f32 %v1632, 1.442695
    %v1634 = vpow.pop %v1633
    %v1635 = vadd.f32 %v1634, 1.0
    %v1636 = vrcp.pop %v1635
    %v1637 = vmul.f32 1.0, %v1636
    %v1638 = vtanh.pop %v1631
    %v1639 = vmul.f32 %v1637, %v1576
    %1641 = vrot.lane.b32.xlu0 %v1638, 32
    %v1642 = vpop.permute.xlu0 %1641
    %v1644 = vmul.f32 %v1637, %v1642
    %1646 = vrot.lane.b32.xlu0 %v1644, 32
    %v1647 = vpop.permute.xlu0 %1646
    %v1649 = vadd.f32 %v1639, %v1647
    %v1650 = vtanh.pop %v1649
    %1652 = vrot.lane.b32.xlu0 %v1650, 32
    %v1653 = vpop.permute.xlu0 %1652
    %v1655 = vmul.f32 %v1637, %v1653
    %v1656 = vmax.f32 %v1655, 0.0
    %v1657 = vpack.c.bf16 %v1656, %v1656
    %v1658 = vld [vmem:[%s3] sm:$0xf]
    %v1659 = vld [vmem:[%s3 + $0x4] sm:$0xf]
    %v1660 = vld [vmem:[%s3 + $0x8] sm:$0xf]
    %v1661 = vld [vmem:[%s3 + $0xc] sm:$0xf]
    %v1662 = vld [vmem:[#allocation8] sm:$0x1]
    %v1664 = vlaneseq
    %v1665 = vshrl.u32 %v1664, 7
    %v1666 = vsub.s32 0, %v1665
    %v1667 = vrot.slane %v1662, %v1666
    %1670 = vrot.lane.b32.xlu0 %v1657, 64
    %v1671 = vpop.permute.xlu0 %1670
    %v1676 = vunpack.c.l.b16 %v1658
    %v1677 = vunpack.c.l.b16 %v1659
    %v1678 = vunpack.c.l.b16 %v1660
    %v1679 = vunpack.c.l.b16 %v1661
    %v1680 = vpack.c.b16 %v1677, %v1676
    %v1681 = vpack.c.b16 %v1679, %v1678
    %v1685 = vsel %vm266, %v1671, 0
    %1687 = vmatprep.subr.bf16.mxu0 0
    %1688 = vmatpush1.bf16.msra.mxu0 %v1680
    %1689 = vmatprep.subr.bf16.mxu0 0
    %1690 = vmatpush1.bf16.msra.mxu0 %v1681
    %1691 = vmatprep.subr.bf16.mxu0 0
    %1692 = vmatpush1.bf16.msra.mxu0 0
    %1693 = vmatprep.subr.bf16.mxu0 0
    %1694 = vmatpush1.bf16.msra.mxu0 0
    %1695 = vmatprep.subr.bf16.mxu0 0
    %1696 = vmatpush1.bf16.msra.mxu0 0
    %1697 = vmatprep.subr.bf16.mxu0 0
    %1698 = vmatpush1.bf16.msra.mxu0 0
    %1699 = vmatprep.subr.bf16.mxu0 0
    %1700 = vmatpush1.bf16.msra.mxu0 0
    %1701 = vmatprep.subr.bf16.mxu0 0
    %1702 = vmatpush1.bf16.msra.mxu0 0
    %1703 = vmatprep.subr.bf16.mxu0 0
    %1704 = vmatpush1.bf16.msra.mxu0 0
    %1705 = vmatprep.subr.bf16.mxu0 0
    %1706 = vmatpush1.bf16.msra.mxu0 0
    %1707 = vmatprep.subr.bf16.mxu0 0
    %1708 = vmatpush1.bf16.msra.mxu0 0
    %1709 = vmatprep.subr.bf16.mxu0 0
    %1710 = vmatpush1.bf16.msra.mxu0 0
    %1711 = vmatprep.subr.bf16.mxu0 0
    %1712 = vmatpush1.bf16.msra.mxu0 0
    %1713 = vmatprep.subr.bf16.mxu0 0
    %1714 = vmatpush1.bf16.msra.mxu0 0
    %1715 = vmatprep.subr.bf16.mxu0 0
    %1716 = vmatpush1.bf16.msra.mxu0 0
    %1717 = vmatprep.subr.bf16.mxu0 0
    %1718 = vmatpush1.bf16.msra.mxu0 0
    %1719 = vmatprep.mubr.bf16.mxu0 0
    %1720 = vmatmul.mubr.bf16.gmra.mrb[0].mxu0 %v1685
    %v1721 = vpop.f32.mrb[0].mxu0
    %v1722 = vadd.f32 %v1667, %v1721
    %v1723 = vpop.f32.mrb[0].mxu0
    %v1724 = vpop.f32.mrb[0].mxu0
    %v1725 = vpop.f32.mrb[0].mxu0
    %1726 = vdwg.mxu0
    %vm1727 = vcmask 23552
    %1728 = vst.msk [vmem:[%s11] sm:$0xff] %vm1727, %v1722
    // Predicated region
    $region70: #{tpu_custom_call.1} parent=1 // pred_check
      _
    $region71: #{tpu_custom_call.1} parent=1 // pred_check_branch
      %1730 = sbr.rel (0) target = $region73
    $region72: #{tpu_custom_call.1} parent=1 // pred_region
      _
    $region73: #{tpu_custom_call.1} parent=1 // pred_fallthru
      _
    // Predicated region
    $region74: #{tpu_custom_call.1} parent=1 // pred_check
      _
    $region75: #{tpu_custom_call.1} parent=1 // pred_check_branch
      %1732 = sbr.rel (0) target = $region77
    $region76: #{tpu_custom_call.1} parent=1 // pred_region
      _
    $region77: #{tpu_custom_call.1} parent=1 // pred_fallthru
      _
    %1733 = vsyncpa [#allocation5], 1
    %1734 = vsyncpa [#allocation7], 1
    %1735 = vsyncpa [#allocation10], 1
    %1736 = vsyncpa [#allocation13], 1

</llo_original>
